<compile_context>
chip_gen: v7x
topology: tpu7x:2x2x1
jax: 0.10.0
libtpu: 0.0.40
codegen_flags: <defaults>
</compile_context>

<pallas_src>
import functools

import jax
import jax.numpy as jnp
from jax.experimental import pallas as pl
from jax.experimental.pallas import tpu as pltpu


def _fcn_head_kernel(x_ref, w1_ref, b1_ref, w2_ref, b2_ref, o_ref, *, wpad, lout):
    # x_ref : (Cin, Lin_k)   bf16  zero-padded image, spatial flattened (row-major, width W+2)
    # w1_ref: (9, Km, Cin)   bf16  conv3x3 weight, BN scale folded, tap-major (dy*3+dx)
    # b1_ref: (Km, 1)        f32   folded BN shift
    # w2_ref: (Co, Km)       bf16  1x1 conv weight
    # b2_ref: (Co, 1)        f32   1x1 conv bias
    # o_ref : (Co, H*(W+2))  f32   output frame (junk columns x >= W dropped in wrapper)
    km = w1_ref.shape[1]
    acc = jnp.zeros((km, lout), jnp.float32)
    # Implicit im2col: tap (dy, dx) contributes w_tap @ x[flat + dy*(W+2)+dx],
    # i.e. a matmul against a contiguous lane-offset slice -- no reshapes.
    for tap in range(9):
        dy, dx = tap // 3, tap % 3
        off = dy * wpad + dx
        xs = x_ref[:, off:off + lout]                      # (Cin, lout)
        acc = acc + jnp.dot(w1_ref[tap], xs, preferred_element_type=jnp.float32)
    h = jnp.maximum(acc + b1_ref[...], 0.0)                # BN shift + ReLU (f32)
    # TODO(synk): nn.Dropout(0.1) is identity at inference; training-mode dropout
    # (pltpu.prng_* mask + 1/(1-p) rescale) is intentionally not implemented.
    out = jnp.dot(w2_ref[...], h.astype(jnp.bfloat16),
                  preferred_element_type=jnp.float32) + b2_ref[...]
    o_ref[...] = out.astype(o_ref.dtype)


def _round_up(x, m):
    return (x + m - 1) // m * m


def fcn_head(x, params, bn_eps=1e-5):
    """_FCNHead forward (eval mode). x: (B, Cin, H, W) f32 NCHW -> (B, Cout, H, W) f32."""
    B, Cin, H, W = x.shape
    w1 = params["w1"].astype(jnp.float32)            # (Cmid, Cin, 3, 3)
    Cmid = w1.shape[0]
    w2 = params["w2"].astype(jnp.float32)            # (Cout, Cmid)
    Cout = w2.shape[0]
    Km = _round_up(Cmid, 8)                          # sublane-pad intermediate channels
    Co = _round_up(Cout, 8)                          # sublane-pad output channels
    Wp = W + 2
    Lin = (H + 2) * Wp                               # flattened padded image length
    Lout = H * Wp                                    # flattened output frame length
    max_off = 2 * Wp + 2
    Lin_k = Lout + max_off                           # = Lin + 2 (keeps all tap slices in-bounds)

    # ---- glue: fold BatchNorm (inference, running stats) into the conv3x3 ----
    scale = params["bn_gamma"] * jax.lax.rsqrt(params["bn_var"] + bn_eps)   # (Cmid,)
    shift = params["bn_beta"] - scale * params["bn_mean"]                   # (Cmid,)
    w1_taps = jnp.transpose(w1, (2, 3, 0, 1)).reshape(9, Cmid, Cin)         # tap = dy*3+dx
    w1_f = jnp.pad(w1_taps * scale[None, :, None],
                   ((0, 0), (0, Km - Cmid), (0, 0))).astype(jnp.bfloat16)   # (9, Km, Cin)
    b1_f = jnp.pad(shift, (0, Km - Cmid))[:, None].astype(jnp.float32)      # (Km, 1)
    w2_f = jnp.pad(w2, ((0, Co - Cout), (0, Km - Cmid))).astype(jnp.bfloat16)  # (Co, Km)
    b2_f = jnp.pad(params["b2"].astype(jnp.float32), (0, Co - Cout))[:, None]  # (Co, 1)

    # ---- glue: 1-pixel zero pad + flatten spatial (no im2col materialization) ----
    xflat = jnp.pad(x.astype(jnp.float32), ((0, 0), (0, 0), (1, 1), (1, 1)))
    xflat = xflat.reshape(B, Cin, Lin)
    xflat = jnp.pad(xflat, ((0, 0), (0, 0), (0, Lin_k - Lin))).astype(jnp.bfloat16)

    kernel = functools.partial(_fcn_head_kernel, wpad=Wp, lout=Lout)

    # VMEM budget (double-buffered blocks + f32 intermediates), with headroom.
    est = (2 * Cin * Lin_k * 2                      # x block, bf16, double-buffered
           + 2 * (9 * Km * Cin + Co * Km) * 2       # weight blocks, bf16
           + 2 * (Km + Co) * 4                      # bias blocks, f32
           + 2 * Co * Lout * 4                      # out block, f32, double-buffered
           + 4 * Km * Lout * 4)                     # acc / h intermediates, f32
    vmem_limit = int(min(64 * 2**20, max(32 * 2**20, 2 * est)))

    out = pl.pallas_call(
        kernel,
        out_shape=jax.ShapeDtypeStruct((B, Co, Lout), jnp.float32),
        grid=(B,),
        in_specs=[
            pl.BlockSpec((None, Cin, Lin_k), lambda b: (b, 0, 0)),  # padded image (bf16)
            pl.BlockSpec((9, Km, Cin), lambda b: (0, 0, 0)),        # folded conv3x3 weight
            pl.BlockSpec((Km, 1), lambda b: (0, 0)),                # BN shift
            pl.BlockSpec((Co, Km), lambda b: (0, 0)),               # 1x1 conv weight
            pl.BlockSpec((Co, 1), lambda b: (0, 0)),                # 1x1 conv bias
        ],
        out_specs=pl.BlockSpec((None, Co, Lout), lambda b: (b, 0, 0)),
        compiler_params=pltpu.CompilerParams(
            dimension_semantics=("parallel",),
            vmem_limit_bytes=vmem_limit),
    )(xflat, w1_f, b1_f, w2_f, b2_f)

    # (B, Co, H*(W+2)) -> drop channel padding and the 2 junk columns per row.
    return out.reshape(B, Co, H, Wp)[:, :Cout, :, :W]


def fcn_head_reference(x, params, bn_eps=1e-5):
    """Pure-JAX f32 reference of _FCNHead forward (inference mode)."""
    y = jax.lax.conv_general_dilated(
        x, params["w1"], window_strides=(1, 1), padding="SAME",
        dimension_numbers=("NCHW", "OIHW", "NCHW"),
        precision=jax.lax.Precision.HIGHEST)
    scale = params["bn_gamma"] * jax.lax.rsqrt(params["bn_var"] + bn_eps)
    shift = params["bn_beta"] - scale * params["bn_mean"]
    y = y * scale[None, :, None, None] + shift[None, :, None, None]
    y = jnp.maximum(y, 0.0)
    # Dropout(0.1) is identity in eval mode.
    out = jnp.einsum("oc,bchw->bohw", params["w2"], y,
                     precision=jax.lax.Precision.HIGHEST)
    return out + params["b2"][None, :, None, None]


if __name__ == "__main__":
    # _FCNHead(in_channels=16, channels=4): inter_channels = 16 // 4 = 4.
    B, Cin, H, W = 2, 16, 16, 16
    Cmid, Cout = Cin // 4, 4

    key = jax.random.PRNGKey(0)
    ks = jax.random.split(key, 8)
    params = {
        "w1": 0.1 * jax.random.normal(ks[0], (Cmid, Cin, 3, 3), jnp.float32),
        "bn_gamma": 1.0 + 0.1 * jax.random.normal(ks[1], (Cmid,), jnp.float32),
        "bn_beta": 0.1 * jax.random.normal(ks[2], (Cmid,), jnp.float32),
        "bn_mean": 0.1 * jax.random.normal(ks[3], (Cmid,), jnp.float32),
        "bn_var": jnp.abs(jax.random.normal(ks[4], (Cmid,), jnp.float32)) + 0.5,
        "w2": 0.1 * jax.random.normal(ks[5], (Cout, Cmid), jnp.float32),
        "b2": 0.1 * jax.random.normal(ks[6], (Cout,), jnp.float32),
    }
    x = jax.random.normal(ks[7], (B, Cin, H, W), jnp.float32)

    out = jax.block_until_ready(fcn_head(x, params))
    ref = fcn_head_reference(x, params)

    assert out.shape == (B, Cout, H, W)
    max_err = float(jnp.max(jnp.abs(out - ref)))
    assert jnp.allclose(out, ref, atol=5e-2, rtol=5e-2), (
        f"mismatch vs reference (max abs err {max_err})")
    print("KERNEL_OK")
</pallas_src>

<mosaic_0001>
module attributes {stable_mosaic.version = 11 : i64} {
  func.func @_fcn_head_kernel(%arg0: i32, %arg1: memref<1x16x326xbf16, #tpu.memory_space<vmem>>, %arg2: memref<9x8x16xbf16, #tpu.memory_space<vmem>>, %arg3: memref<8x1xf32, #tpu.memory_space<vmem>>, %arg4: memref<8x8xbf16, #tpu.memory_space<vmem>>, %arg5: memref<8x1xf32, #tpu.memory_space<vmem>>, %arg6: memref<1x8x288xf32, #tpu.memory_space<vmem>>) attributes {dimension_semantics = [#tpu.dimension_semantics<parallel>], iteration_bounds = array<i64: 2>, scalar_prefetch = 0 : i64, scratch_operands = 0 : i64, tpu.core_type = #tpu.core_type<tc>, window_params = [{transform_indices = @transform_0, window_bounds = array<i64: 1, 16, 326>}, {pipeline_mode = #tpu.pipeline_mode<synchronous>, transform_indices = @transform_1, window_bounds = array<i64: 9, 8, 16>}, {pipeline_mode = #tpu.pipeline_mode<synchronous>, transform_indices = @transform_2, window_bounds = array<i64: 8, 1>}, {pipeline_mode = #tpu.pipeline_mode<synchronous>, transform_indices = @transform_3, window_bounds = array<i64: 8, 8>}, {pipeline_mode = #tpu.pipeline_mode<synchronous>, transform_indices = @transform_4, window_bounds = array<i64: 8, 1>}, {transform_indices = @transform_5, window_bounds = array<i64: 1, 8, 288>}]} {
    %cst = arith.constant 0.000000e+00 : f32
    %0 = vector.broadcast %cst : f32 to vector<8x288xf32>
    %c0 = arith.constant 0 : index
    %c0_0 = arith.constant 0 : index
    %c0_1 = arith.constant 0 : index
    %1 = vector.load %arg1[%c0, %c0_0, %c0_1] : memref<1x16x326xbf16, #tpu.memory_space<vmem>>, vector<1x16x288xbf16>
    %2 = vector.shape_cast %1 : vector<1x16x288xbf16> to vector<16x288xbf16>
    %c0_2 = arith.constant 0 : index
    %c0_3 = arith.constant 0 : index
    %c0_4 = arith.constant 0 : index
    %3 = vector.load %arg2[%c0_2, %c0_3, %c0_4] : memref<9x8x16xbf16, #tpu.memory_space<vmem>>, vector<1x8x16xbf16>
    %4 = vector.shape_cast %3 : vector<1x8x16xbf16> to vector<8x16xbf16>
    %cst_5 = arith.constant dense<0.000000e+00> : vector<8x288xf32>
    %5 = tpu.matmul %4, %2, %cst_5 {dimension_numbers = #tpu.dot_dimension_numbers<[1], [0], [0], [1], [0, 0, 1, 1], [], []>} : vector<8x16xbf16>, vector<16x288xbf16>, vector<8x288xf32> -> vector<8x288xf32>
    %6 = arith.addf %0, %5 : vector<8x288xf32>
    %c0_6 = arith.constant 0 : index
    %c0_7 = arith.constant 0 : index
    %c1 = arith.constant 1 : index
    %7 = vector.load %arg1[%c0_6, %c0_7, %c1] : memref<1x16x326xbf16, #tpu.memory_space<vmem>>, vector<1x16x288xbf16>
    %8 = vector.shape_cast %7 : vector<1x16x288xbf16> to vector<16x288xbf16>
    %c1_8 = arith.constant 1 : index
    %c0_9 = arith.constant 0 : index
    %c0_10 = arith.constant 0 : index
    %9 = vector.load %arg2[%c1_8, %c0_9, %c0_10] : memref<9x8x16xbf16, #tpu.memory_space<vmem>>, vector<1x8x16xbf16>
    %10 = vector.shape_cast %9 : vector<1x8x16xbf16> to vector<8x16xbf16>
    %cst_11 = arith.constant dense<0.000000e+00> : vector<8x288xf32>
    %11 = tpu.matmul %10, %8, %cst_11 {dimension_numbers = #tpu.dot_dimension_numbers<[1], [0], [0], [1], [0, 0, 1, 1], [], []>} : vector<8x16xbf16>, vector<16x288xbf16>, vector<8x288xf32> -> vector<8x288xf32>
    %12 = arith.addf %6, %11 : vector<8x288xf32>
    %c0_12 = arith.constant 0 : index
    %c0_13 = arith.constant 0 : index
    %c2 = arith.constant 2 : index
    %13 = vector.load %arg1[%c0_12, %c0_13, %c2] : memref<1x16x326xbf16, #tpu.memory_space<vmem>>, vector<1x16x288xbf16>
    %14 = vector.shape_cast %13 : vector<1x16x288xbf16> to vector<16x288xbf16>
    %c2_14 = arith.constant 2 : index
    %c0_15 = arith.constant 0 : index
    %c0_16 = arith.constant 0 : index
    %15 = vector.load %arg2[%c2_14, %c0_15, %c0_16] : memref<9x8x16xbf16, #tpu.memory_space<vmem>>, vector<1x8x16xbf16>
    %16 = vector.shape_cast %15 : vector<1x8x16xbf16> to vector<8x16xbf16>
    %cst_17 = arith.constant dense<0.000000e+00> : vector<8x288xf32>
    %17 = tpu.matmul %16, %14, %cst_17 {dimension_numbers = #tpu.dot_dimension_numbers<[1], [0], [0], [1], [0, 0, 1, 1], [], []>} : vector<8x16xbf16>, vector<16x288xbf16>, vector<8x288xf32> -> vector<8x288xf32>
    %18 = arith.addf %12, %17 : vector<8x288xf32>
    %c0_18 = arith.constant 0 : index
    %c0_19 = arith.constant 0 : index
    %c18 = arith.constant 18 : index
    %19 = vector.load %arg1[%c0_18, %c0_19, %c18] : memref<1x16x326xbf16, #tpu.memory_space<vmem>>, vector<1x16x288xbf16>
    %20 = vector.shape_cast %19 : vector<1x16x288xbf16> to vector<16x288xbf16>
    %c3 = arith.constant 3 : index
    %c0_20 = arith.constant 0 : index
    %c0_21 = arith.constant 0 : index
    %21 = vector.load %arg2[%c3, %c0_20, %c0_21] : memref<9x8x16xbf16, #tpu.memory_space<vmem>>, vector<1x8x16xbf16>
    %22 = vector.shape_cast %21 : vector<1x8x16xbf16> to vector<8x16xbf16>
    %cst_22 = arith.constant dense<0.000000e+00> : vector<8x288xf32>
    %23 = tpu.matmul %22, %20, %cst_22 {dimension_numbers = #tpu.dot_dimension_numbers<[1], [0], [0], [1], [0, 0, 1, 1], [], []>} : vector<8x16xbf16>, vector<16x288xbf16>, vector<8x288xf32> -> vector<8x288xf32>
    %24 = arith.addf %18, %23 : vector<8x288xf32>
    %c0_23 = arith.constant 0 : index
    %c0_24 = arith.constant 0 : index
    %c19 = arith.constant 19 : index
    %25 = vector.load %arg1[%c0_23, %c0_24, %c19] : memref<1x16x326xbf16, #tpu.memory_space<vmem>>, vector<1x16x288xbf16>
    %26 = vector.shape_cast %25 : vector<1x16x288xbf16> to vector<16x288xbf16>
    %c4 = arith.constant 4 : index
    %c0_25 = arith.constant 0 : index
    %c0_26 = arith.constant 0 : index
    %27 = vector.load %arg2[%c4, %c0_25, %c0_26] : memref<9x8x16xbf16, #tpu.memory_space<vmem>>, vector<1x8x16xbf16>
    %28 = vector.shape_cast %27 : vector<1x8x16xbf16> to vector<8x16xbf16>
    %cst_27 = arith.constant dense<0.000000e+00> : vector<8x288xf32>
    %29 = tpu.matmul %28, %26, %cst_27 {dimension_numbers = #tpu.dot_dimension_numbers<[1], [0], [0], [1], [0, 0, 1, 1], [], []>} : vector<8x16xbf16>, vector<16x288xbf16>, vector<8x288xf32> -> vector<8x288xf32>
    %30 = arith.addf %24, %29 : vector<8x288xf32>
    %c0_28 = arith.constant 0 : index
    %c0_29 = arith.constant 0 : index
    %c20 = arith.constant 20 : index
    %31 = vector.load %arg1[%c0_28, %c0_29, %c20] : memref<1x16x326xbf16, #tpu.memory_space<vmem>>, vector<1x16x288xbf16>
    %32 = vector.shape_cast %31 : vector<1x16x288xbf16> to vector<16x288xbf16>
    %c5 = arith.constant 5 : index
    %c0_30 = arith.constant 0 : index
    %c0_31 = arith.constant 0 : index
    %33 = vector.load %arg2[%c5, %c0_30, %c0_31] : memref<9x8x16xbf16, #tpu.memory_space<vmem>>, vector<1x8x16xbf16>
    %34 = vector.shape_cast %33 : vector<1x8x16xbf16> to vector<8x16xbf16>
    %cst_32 = arith.constant dense<0.000000e+00> : vector<8x288xf32>
    %35 = tpu.matmul %34, %32, %cst_32 {dimension_numbers = #tpu.dot_dimension_numbers<[1], [0], [0], [1], [0, 0, 1, 1], [], []>} : vector<8x16xbf16>, vector<16x288xbf16>, vector<8x288xf32> -> vector<8x288xf32>
    %36 = arith.addf %30, %35 : vector<8x288xf32>
    %c0_33 = arith.constant 0 : index
    %c0_34 = arith.constant 0 : index
    %c36 = arith.constant 36 : index
    %37 = vector.load %arg1[%c0_33, %c0_34, %c36] : memref<1x16x326xbf16, #tpu.memory_space<vmem>>, vector<1x16x288xbf16>
    %38 = vector.shape_cast %37 : vector<1x16x288xbf16> to vector<16x288xbf16>
    %c6 = arith.constant 6 : index
    %c0_35 = arith.constant 0 : index
    %c0_36 = arith.constant 0 : index
    %39 = vector.load %arg2[%c6, %c0_35, %c0_36] : memref<9x8x16xbf16, #tpu.memory_space<vmem>>, vector<1x8x16xbf16>
    %40 = vector.shape_cast %39 : vector<1x8x16xbf16> to vector<8x16xbf16>
    %cst_37 = arith.constant dense<0.000000e+00> : vector<8x288xf32>
    %41 = tpu.matmul %40, %38, %cst_37 {dimension_numbers = #tpu.dot_dimension_numbers<[1], [0], [0], [1], [0, 0, 1, 1], [], []>} : vector<8x16xbf16>, vector<16x288xbf16>, vector<8x288xf32> -> vector<8x288xf32>
    %42 = arith.addf %36, %41 : vector<8x288xf32>
    %c0_38 = arith.constant 0 : index
    %c0_39 = arith.constant 0 : index
    %c37 = arith.constant 37 : index
    %43 = vector.load %arg1[%c0_38, %c0_39, %c37] : memref<1x16x326xbf16, #tpu.memory_space<vmem>>, vector<1x16x288xbf16>
    %44 = vector.shape_cast %43 : vector<1x16x288xbf16> to vector<16x288xbf16>
    %c7 = arith.constant 7 : index
    %c0_40 = arith.constant 0 : index
    %c0_41 = arith.constant 0 : index
    %45 = vector.load %arg2[%c7, %c0_40, %c0_41] : memref<9x8x16xbf16, #tpu.memory_space<vmem>>, vector<1x8x16xbf16>
    %46 = vector.shape_cast %45 : vector<1x8x16xbf16> to vector<8x16xbf16>
    %cst_42 = arith.constant dense<0.000000e+00> : vector<8x288xf32>
    %47 = tpu.matmul %46, %44, %cst_42 {dimension_numbers = #tpu.dot_dimension_numbers<[1], [0], [0], [1], [0, 0, 1, 1], [], []>} : vector<8x16xbf16>, vector<16x288xbf16>, vector<8x288xf32> -> vector<8x288xf32>
    %48 = arith.addf %42, %47 : vector<8x288xf32>
    %c0_43 = arith.constant 0 : index
    %c0_44 = arith.constant 0 : index
    %c38 = arith.constant 38 : index
    %49 = vector.load %arg1[%c0_43, %c0_44, %c38] : memref<1x16x326xbf16, #tpu.memory_space<vmem>>, vector<1x16x288xbf16>
    %50 = vector.shape_cast %49 : vector<1x16x288xbf16> to vector<16x288xbf16>
    %c8 = arith.constant 8 : index
    %c0_45 = arith.constant 0 : index
    %c0_46 = arith.constant 0 : index
    %51 = vector.load %arg2[%c8, %c0_45, %c0_46] : memref<9x8x16xbf16, #tpu.memory_space<vmem>>, vector<1x8x16xbf16>
    %52 = vector.shape_cast %51 : vector<1x8x16xbf16> to vector<8x16xbf16>
    %cst_47 = arith.constant dense<0.000000e+00> : vector<8x288xf32>
    %53 = tpu.matmul %52, %50, %cst_47 {dimension_numbers = #tpu.dot_dimension_numbers<[1], [0], [0], [1], [0, 0, 1, 1], [], []>} : vector<8x16xbf16>, vector<16x288xbf16>, vector<8x288xf32> -> vector<8x288xf32>
    %54 = arith.addf %48, %53 : vector<8x288xf32>
    %c0_48 = arith.constant 0 : index
    %c0_49 = arith.constant 0 : index
    %55 = vector.load %arg3[%c0_48, %c0_49] : memref<8x1xf32, #tpu.memory_space<vmem>>, vector<8x1xf32>
    %56 = vector.broadcast %55 : vector<8x1xf32> to vector<8x288xf32>
    %57 = arith.addf %54, %56 : vector<8x288xf32>
    %cst_50 = arith.constant 0.000000e+00 : f32
    %58 = vector.broadcast %cst_50 : f32 to vector<8x288xf32>
    %59 = arith.maximumf %57, %58 : vector<8x288xf32>
    %c0_51 = arith.constant 0 : index
    %c0_52 = arith.constant 0 : index
    %60 = vector.load %arg4[%c0_51, %c0_52] : memref<8x8xbf16, #tpu.memory_space<vmem>>, vector<8x8xbf16>
    %61 = arith.truncf %59 : vector<8x288xf32> to vector<8x288xbf16>
    %cst_53 = arith.constant dense<0.000000e+00> : vector<8x288xf32>
    %62 = tpu.matmul %60, %61, %cst_53 {dimension_numbers = #tpu.dot_dimension_numbers<[1], [0], [0], [1], [0, 0, 1, 1], [], []>} : vector<8x8xbf16>, vector<8x288xbf16>, vector<8x288xf32> -> vector<8x288xf32>
    %c0_54 = arith.constant 0 : index
    %c0_55 = arith.constant 0 : index
    %63 = vector.load %arg5[%c0_54, %c0_55] : memref<8x1xf32, #tpu.memory_space<vmem>>, vector<8x1xf32>
    %64 = vector.broadcast %63 : vector<8x1xf32> to vector<8x288xf32>
    %65 = arith.addf %62, %64 : vector<8x288xf32>
    %c0_56 = arith.constant 0 : index
    %c0_57 = arith.constant 0 : index
    %c0_58 = arith.constant 0 : index
    %66 = vector.load %arg6[%c0_56, %c0_57, %c0_58] : memref<1x8x288xf32, #tpu.memory_space<vmem>>, vector<1x8x288xf32>
    %67 = vector.shape_cast %66 : vector<1x8x288xf32> to vector<8x288xf32>
    %68 = vector.shape_cast %65 : vector<8x288xf32> to vector<1x8x288xf32>
    tpu.vector_store %arg6[%c0_56, %c0_57, %c0_58], %68 {strides = array<i32>} : memref<1x8x288xf32, #tpu.memory_space<vmem>>, vector<1x8x288xf32>,
    return
  }
  func.func @transform_0(%arg0: i32) -> (i32, i32, i32) {
    %c0_i32 = arith.constant 0 : i32
    %c0_i32_0 = arith.constant 0 : i32
    %c0_i32_1 = arith.constant 0 : i32
    return %arg0, %c0_i32, %c0_i32_0 : i32, i32, i32
  }
  func.func @transform_1(%arg0: i32) -> (i32, i32, i32) {
    %c0_i32 = arith.constant 0 : i32
    %c0_i32_0 = arith.constant 0 : i32
    %c0_i32_1 = arith.constant 0 : i32
    %c0_i32_2 = arith.constant 0 : i32
    return %c0_i32, %c0_i32_0, %c0_i32_1 : i32, i32, i32
  }
  func.func @transform_2(%arg0: i32) -> (i32, i32) {
    %c0_i32 = arith.constant 0 : i32
    %c0_i32_0 = arith.constant 0 : i32
    %c0_i32_1 = arith.constant 0 : i32
    return %c0_i32, %c0_i32_0 : i32, i32
  }
  func.func @transform_3(%arg0: i32) -> (i32, i32) {
    %c0_i32 = arith.constant 0 : i32
    %c0_i32_0 = arith.constant 0 : i32
    %c0_i32_1 = arith.constant 0 : i32
    return %c0_i32, %c0_i32_0 : i32, i32
  }
  func.func @transform_4(%arg0: i32) -> (i32, i32) {
    %c0_i32 = arith.constant 0 : i32
    %c0_i32_0 = arith.constant 0 : i32
    %c0_i32_1 = arith.constant 0 : i32
    return %c0_i32, %c0_i32_0 : i32, i32
  }
  func.func @transform_5(%arg0: i32) -> (i32, i32, i32) {
    %c0_i32 = arith.constant 0 : i32
    %c0_i32_0 = arith.constant 0 : i32
    %c0_i32_1 = arith.constant 0 : i32
    return %arg0, %c0_i32, %c0_i32_0 : i32, i32, i32
  }
}

</mosaic_0001>

<llo_original>
// kernel: tpu_custom_call.1
$region0: #{tpu_custom_call.1}
  #allocation0 [shape = 'u32[]', space=smem, size = 0x4, offset = 0x4, fixed_abs, tag = 'smem constant byte address 0x4 - core index']
  #allocation1 [shape = 'u32[144,128]{1,0:T(1,128)}', space=vmem, size = 0x12000, scoped, tag = 'internal scratch']
  %s0 = inlined_call_operand.hbm [shape: bf16[2,16,326], index: 0, kind: input, shape index: {}]
  %s1 = inlined_call_operand.hbm [shape: bf16[9,8,16], index: 1, kind: input, shape index: {}]
  %s2 = inlined_call_operand.vmem [shape: f32[8,1], index: 2, kind: input, shape index: {}]
  %s3 = inlined_call_operand.vmem [shape: bf16[8,8], index: 3, kind: input, shape index: {}]
  %s4 = inlined_call_operand.vmem [shape: f32[8,1], index: 4, kind: input, shape index: {}]
  %s5 = inlined_call_operand.hbm [shape: f32[2,8,288], index: 5, kind: output, shape index: {}]
  %s6 = sld [smem:[#allocation0]]
  $region61: #{tpu_custom_call.1} parent=0
    _
  %s8 = ssub.s32 1, %s6
  %s9 = scalar_select 0, %s8, %s6
  $region1: #{tpu_custom_call.1} parent=0
    #allocation2 [shape = 'u8[24576]{0}', space=vmem, size = 0x6000, scoped, tag = 'input window, operand 0']
    #allocation3 [shape = 's32[2]{0}', space=sflag, size = 0x8, scoped, tag = 'scoped memory for tpu_custom_call.1']
    #allocation4 [shape = 's32[2]{0}', space=sflag, size = 0x8, scoped, tag = 'scoped memory for tpu_custom_call.1']
    #allocation5 [shape = 'u8[18432]{0}', space=vmem, size = 0x4800, scoped, tag = 'input window, operand 1, single buffered']
    #allocation6 [shape = 's32[1]{0}', space=sflag, size = 0x4, scoped, tag = 'scoped memory for tpu_custom_call.1']
    #allocation7 [shape = 'u8[24576]{0}', space=vmem, size = 0x6000, scoped, tag = 'output window, operand 0']
    %10 = vsyncpa [#allocation3], 0
    %s11 = scalar_lea.sflag [#allocation3], 1
    %12 = vsyncpa %s11, 0
    %13 = vsyncpa [#allocation6], 0
    %14 = vsyncpa [#allocation4], 0
    %s15 = scalar_lea.sflag [#allocation4], 1
    %16 = vsyncpa %s15, 0
    loop: start=0, step=1, limit=4
    $region2: #{tpu_custom_call.1} parent=1 // loop_pre_header
      _
    $region3: #{tpu_custom_call.1} parent=1 // loop_header
      %s18 = sphi 0, %s22
      %p19 = scmp.ge.s32.totalorder %s18, 4
      %s28 = sphi 0, %s30
      %s31 = sphi 0, %s28
      %s32 = sphi 0, %s31
      %s48 = sphi 0, %s32
      %s52 = sphi 0, %s52
      %s54 = sphi 0, %s52
      %s55 = sphi 0, %s54
      %s69 = sphi 0, %s55
      %s73 = sphi 0, %s73
      %s75 = sphi 0, %s73
      %s76 = sphi 0, %s75
      %s90 = sphi 0, %s76
      %s94 = sphi 0, %s94
      %s96 = sphi 0, %s94
      %s97 = sphi 0, %s96
      %s111 = sphi 0, %s97
      %s115 = sphi 0, %s115
      %s117 = sphi 0, %s115
      %s118 = sphi 0, %s117
      %s132 = sphi 0, %s118
      %s138 = sphi 0, %s140
      %s141 = sphi 0, %s138
      %s142 = sphi 0, %s141
      %s158 = sphi 0, %s142
    $region4: #{tpu_custom_call.1} parent=1 // loop_header_branch
      %21 = sbr.rel (%p19) target = $region8
    $region5: #{tpu_custom_call.1} parent=1 // loop_body
      %s23 = ssub.s32 %s18, 1
      %s24 = ssub.s32 %s18, 2
      %s25 = sadd.s32 %s18, 1
      %s26 = ssub.s32 %s18, %s25
      %p27 = scmp.eq.s32.totalorder %s26, 0
      %s29 = sadd.s32 %s28, 1
      %s30 = scalar_select %p27, %s28, %s29
      %p33 = pneg %p27
      %p34 = scmp.eq.s32.totalorder %s18, 1
      %p35 = por %p33, %p34
      %p36 = scmp.ne.s32.totalorder %s28, %s31
      %p37 = scmp.eq.s32.totalorder %s18, 0
      %p38 = por %p36, %p37
      %p39 = scmp.ne.s32.totalorder %s28, %s31
      %p40 = scmp.eq.s32.totalorder %s23, 1
      %p41 = por %p39, %p40
      %p42 = scmp.ne.s32.totalorder %s31, %s32
      %p43 = scmp.eq.s32.totalorder %s23, 0
      %p44 = por %p42, %p43
      %p45 = scmp.ne.s32.totalorder %s31, %s32
      %p46 = scmp.eq.s32.totalorder %s24, 1
      %p47 = por %p45, %p46
      %p49 = scmp.ne.s32.totalorder %s32, %s48
      %p50 = scmp.eq.s32.totalorder %s24, 0
      %p51 = por %p49, %p50
      %s53 = sadd.s32 %s52, 1
      %p56 = scmp.eq.s32.totalorder %s18, 1
      %p57 = scmp.ne.s32.totalorder %s52, %s54
      %p58 = scmp.eq.s32.totalorder %s18, 0
      %p59 = por %p57, %p58
      %p60 = scmp.ne.s32.totalorder %s52, %s54
      %p61 = scmp.eq.s32.totalorder %s23, 1
      %p62 = por %p60, %p61
      %p63 = scmp.ne.s32.totalorder %s54, %s55
      %p64 = scmp.eq.s32.totalorder %s23, 0
      %p65 = por %p63, %p64
      %p66 = scmp.ne.s32.totalorder %s54, %s55
      %p67 = scmp.eq.s32.totalorder %s24, 1
      %p68 = por %p66, %p67
      %p70 = scmp.ne.s32.totalorder %s55, %s69
      %p71 = scmp.eq.s32.totalorder %s24, 0
      %p72 = por %p70, %p71
      %s74 = sadd.s32 %s73, 1
      %p77 = scmp.eq.s32.totalorder %s18, 1
      %p78 = scmp.ne.s32.totalorder %s73, %s75
      %p79 = scmp.eq.s32.totalorder %s18, 0
      %p80 = por %p78, %p79
      %p81 = scmp.ne.s32.totalorder %s73, %s75
      %p82 = scmp.eq.s32.totalorder %s23, 1
      %p83 = por %p81, %p82
      %p84 = scmp.ne.s32.totalorder %s75, %s76
      %p85 = scmp.eq.s32.totalorder %s23, 0
      %p86 = por %p84, %p85
      %p87 = scmp.ne.s32.totalorder %s75, %s76
      %p88 = scmp.eq.s32.totalorder %s24, 1
      %p89 = por %p87, %p88
      %p91 = scmp.ne.s32.totalorder %s76, %s90
      %p92 = scmp.eq.s32.totalorder %s24, 0
      %p93 = por %p91, %p92
      %s95 = sadd.s32 %s94, 1
      %p98 = scmp.eq.s32.totalorder %s18, 1
      %p99 = scmp.ne.s32.totalorder %s94, %s96
      %p100 = scmp.eq.s32.totalorder %s18, 0
      %p101 = por %p99, %p100
      %p102 = scmp.ne.s32.totalorder %s94, %s96
      %p103 = scmp.eq.s32.totalorder %s23, 1
      %p104 = por %p102, %p103
      %p105 = scmp.ne.s32.totalorder %s96, %s97
      %p106 = scmp.eq.s32.totalorder %s23, 0
      %p107 = por %p105, %p106
      %p108 = scmp.ne.s32.totalorder %s96, %s97
      %p109 = scmp.eq.s32.totalorder %s24, 1
      %p110 = por %p108, %p109
      %p112 = scmp.ne.s32.totalorder %s97, %s111
      %p113 = scmp.eq.s32.totalorder %s24, 0
      %p114 = por %p112, %p113
      %s116 = sadd.s32 %s115, 1
      %p119 = scmp.eq.s32.totalorder %s18, 1
      %p120 = scmp.ne.s32.totalorder %s115, %s117
      %p121 = scmp.eq.s32.totalorder %s18, 0
      %p122 = por %p120, %p121
      %p123 = scmp.ne.s32.totalorder %s115, %s117
      %p124 = scmp.eq.s32.totalorder %s23, 1
      %p125 = por %p123, %p124
      %p126 = scmp.ne.s32.totalorder %s117, %s118
      %p127 = scmp.eq.s32.totalorder %s23, 0
      %p128 = por %p126, %p127
      %p129 = scmp.ne.s32.totalorder %s117, %s118
      %p130 = scmp.eq.s32.totalorder %s24, 1
      %p131 = por %p129, %p130
      %p133 = scmp.ne.s32.totalorder %s118, %s132
      %p134 = scmp.eq.s32.totalorder %s24, 0
      %p135 = por %p133, %p134
      %s136 = ssub.s32 %s18, %s25
      %p137 = scmp.eq.s32.totalorder %s136, 0
      %s139 = sadd.s32 %s138, 1
      %s140 = scalar_select %p137, %s138, %s139
      %p143 = pneg %p137
      %p144 = scmp.eq.s32.totalorder %s18, 1
      %p145 = por %p143, %p144
      %p146 = scmp.ne.s32.totalorder %s138, %s141
      %p147 = scmp.eq.s32.totalorder %s18, 0
      %p148 = por %p146, %p147
      %p149 = scmp.ne.s32.totalorder %s138, %s141
      %p150 = scmp.eq.s32.totalorder %s23, 1
      %p151 = por %p149, %p150
      %p152 = scmp.ne.s32.totalorder %s141, %s142
      %p153 = scmp.eq.s32.totalorder %s23, 0
      %p154 = por %p152, %p153
      %p155 = scmp.ne.s32.totalorder %s141, %s142
      %p156 = scmp.eq.s32.totalorder %s24, 1
      %p157 = por %p155, %p156
      %p159 = scmp.ne.s32.totalorder %s142, %s158
      %p160 = scmp.eq.s32.totalorder %s24, 0
      %p161 = por %p159, %p160
      %p162 = scmp.le.s32.totalorder 1, %s18
      %p163 = scmp.lt.s32.totalorder %s18, 3
      %p164 = pnand %p162, %p163
      %p165 = pneg %p164
      // Predicated region
      $region9: #{tpu_custom_call.1} parent=5 // pred_check
        _
      $region10: #{tpu_custom_call.1} parent=5 // pred_check_branch
        %167 = sbr.rel (%p164) target = $region12
      $region11: #{tpu_custom_call.1} parent=5 // pred_region
        %s168 = ssub.s32 %s18, 1
        // Predicated region
        $region13: #{tpu_custom_call.1} parent=11 // pred_check
          %p169 = pneg %p65
        $region14: #{tpu_custom_call.1} parent=11 // pred_check_branch
          %171 = sbr.rel (%p169) target = $region16
        $region15: #{tpu_custom_call.1} parent=11 // pred_region
          %s173 = ssub.s32 576, 576
          %174 = vsyncadd [#allocation6], %s173
          %s175 = sshll.u32 [#allocation5], 4
          %s176 = int_to_ptr.vmem [resolvable:$true] %s175
          %181 = dma.hbm_to_vmem [thread:$0]  %s1, 576, %s176, [#allocation6], 64, 64, 4
        $region16: #{tpu_custom_call.1} parent=11 // pred_fallthru
          _
        // Predicated region
        $region17: #{tpu_custom_call.1} parent=11 // pred_check
          %p182 = pneg %p86
        $region18: #{tpu_custom_call.1} parent=11 // pred_check_branch
          %184 = sbr.rel (%p182) target = $region20
        $region19: #{tpu_custom_call.1} parent=11 // pred_region
          _
        $region20: #{tpu_custom_call.1} parent=11 // pred_fallthru
          _
        // Predicated region
        $region21: #{tpu_custom_call.1} parent=11 // pred_check
          %p185 = pneg %p107
        $region22: #{tpu_custom_call.1} parent=11 // pred_check_branch
          %187 = sbr.rel (%p185) target = $region24
        $region23: #{tpu_custom_call.1} parent=11 // pred_region
          _
        $region24: #{tpu_custom_call.1} parent=11 // pred_fallthru
          _
        // Predicated region
        $region25: #{tpu_custom_call.1} parent=11 // pred_check
          %p188 = pneg %p128
        $region26: #{tpu_custom_call.1} parent=11 // pred_check_branch
          %190 = sbr.rel (%p188) target = $region28
        $region27: #{tpu_custom_call.1} parent=11 // pred_region
          _
        $region28: #{tpu_custom_call.1} parent=11 // pred_fallthru
          _
      $region12: #{tpu_custom_call.1} parent=5 // pred_fallthru
        _
      %p191 = scmp.lt.s32.totalorder %s18, 2
      // Predicated region
      $region29: #{tpu_custom_call.1} parent=5 // pred_check
        %p192 = pneg %p191
      $region30: #{tpu_custom_call.1} parent=5 // pred_check_branch
        %194 = sbr.rel (%p192) target = $region32
      $region31: #{tpu_custom_call.1} parent=5 // pred_region
        // Predicated region
        $region33: #{tpu_custom_call.1} parent=31 // pred_check
          %p195 = pneg %p38
        $region34: #{tpu_custom_call.1} parent=31 // pred_check_branch
          %197 = sbr.rel (%p195) target = $region36
        $region35: #{tpu_custom_call.1} parent=31 // pred_region
          %s198 = sand.u32 %s28, 1
          %s199 = scalar_lea.sflag [#allocation3], %s198
          %s200 = sand.u32 %s28, 1
          %s201 = smul.addr %s200, 24
          %s202 = scalar_lea.vmem [#allocation2], %s201
          %s204 = ssub.s32 384, 384
          %205 = vsyncadd %s199, %s204
          %s206 = smul.addr %s18, 6
          %s207 = smul.addr %s206, 64
          %s208 = scalar_lea.hbm %s0, %s207
          %s209 = sshll.u32 %s202, 4
          %s210 = int_to_ptr.vmem [resolvable:$true] %s209
          %215 = dma.hbm_to_vmem [thread:$0]  %s208, 384, %s210, %s199, 192, 192, 12
        $region36: #{tpu_custom_call.1} parent=31 // pred_fallthru
          _
      $region32: #{tpu_custom_call.1} parent=5 // pred_fallthru
        _
      %p216 = scmp.le.s32.totalorder 1, %s18
      %p217 = scmp.lt.s32.totalorder %s18, 3
      %p218 = pnand %p216, %p217
      %p219 = pneg %p218
      // Predicated region
      $region37: #{tpu_custom_call.1} parent=5 // pred_check
        _
      $region38: #{tpu_custom_call.1} parent=5 // pred_check_branch
        %221 = sbr.rel (%p218) target = $region40
      $region39: #{tpu_custom_call.1} parent=5 // pred_region
        %s222 = ssub.s32 %s18, 1
        %s223 = sand.u32 %s31, 1
        %s224 = scalar_lea.sflag [#allocation3], %s223
        %s225 = sand.u32 %s31, 1
        %s226 = smul.addr %s225, 24
        %s227 = scalar_lea.vmem [#allocation2], %s226
        // Predicated region
        $region41: #{tpu_custom_call.1} parent=39 // pred_check
          %p228 = pneg %p44
        $region42: #{tpu_custom_call.1} parent=39 // pred_check_branch
          %230 = sbr.rel (%p228) target = $region44
        $region43: #{tpu_custom_call.1} parent=39 // pred_region
          %231 = dma.done %s224, 384
        $region44: #{tpu_custom_call.1} parent=39 // pred_fallthru
          _
        // Predicated region
        $region45: #{tpu_custom_call.1} parent=39 // pred_check
          %p232 = pneg %p65
        $region46: #{tpu_custom_call.1} parent=39 // pred_check_branch
          %234 = sbr.rel (%p232) target = $region48
        $region47: #{tpu_custom_call.1} parent=39 // pred_region
          %235 = dma.done [#allocation6], 576
        $region48: #{tpu_custom_call.1} parent=39 // pred_fallthru
          _
        %s236 = sand.u32 %s31, 1
        %s237 = scalar_lea.sflag [#allocation3], %s236
        %s238 = sand.u32 %s31, 1
        %s239 = smul.addr %s238, 24
        %s240 = scalar_lea.vmem [#allocation2], %s239
        %p241 = pneg %p44
        %p242 = pneg %p41
        %p243 = pneg %p65
        %p244 = pneg %p62
        %p245 = pneg %p86
        %p246 = pneg %p83
        %p247 = pneg %p107
        %p248 = pneg %p104
        %p249 = pneg %p128
        %p250 = pneg %p125
        %p251 = pneg %p154
        %p252 = pneg %p151
        %s253 = sand.u32 %s141, 1
        %s254 = scalar_lea.sflag [#allocation4], %s253
        %s255 = sand.u32 %s141, 1
        %s256 = smul.addr %s255, 24
        %s257 = scalar_lea.vmem [#allocation7], %s256
        %v259 = vld [vmem:[%s227] sm:$0xff]
        %v260 = vld [vmem:[%s227 + $0x8] sm:$0xf]
        %v261 = vld [vmem:[%s227 + $0xc] sm:$0xff]
        %v262 = vld [vmem:[%s227 + $0x14] sm:$0xf]
        %v263 = vld [vmem:[#allocation5] sm:$0xf]
        %s264 = scalar_lea.vmem [#allocation5], 4
        %v265 = vld [vmem:[%s264] sm:$0xf]
        %v270 = vunpack.c.l.b16 %v259
        %v271 = vunpack.c.h.b16 %v259
        %v272 = vunpack.c.l.b16 %v260
        %v273 = vunpack.c.l.b16 %v261
        %v274 = vunpack.c.h.b16 %v261
        %v275 = vunpack.c.l.b16 %v262
        %v276 = vpack.c.b16 %v273, %v270
        %v277 = vpack.c.b16 %v274, %v271
        %v278 = vpack.c.b16 %v275, %v272
        %279 = vrot.lane.b32.xlu0 %v276, 127
        %v280 = vpop.permute.xlu0 %279
        %281 = vrot.lane.b32.xlu0 %v277, 127
        %v282 = vpop.permute.xlu0 %281
        %283 = vrot.lane.b32.xlu0 %v278, 127
        %v284 = vpop.permute.xlu0 %283
        %vm285 = vcmask 1039360
        %v286 = vsel %vm285, %v280, %v282
        %v287 = vsel %vm285, %v282, %v284
        %vm291 = vcmask 130048
        %v293 = vsel %vm291, %v265, 0
        %295 = vmatprep.subr.bf16.mxu0 %v287
        %296 = vmatpush1.bf16.msra.mxu0 %v286
        %297 = vmatprep.subr.bf16.mxu0 0
        %298 = vmatpush1.bf16.msra.mxu0 0
        %299 = vmatprep.subr.bf16.mxu0 0
        %300 = vmatpush1.bf16.msra.mxu0 0
        %301 = vmatprep.subr.bf16.mxu0 0
        %302 = vmatpush1.bf16.msra.mxu0 0
        %303 = vmatprep.subr.bf16.mxu0 0
        %304 = vmatpush1.bf16.msra.mxu0 0
        %305 = vmatprep.subr.bf16.mxu0 0
        %306 = vmatpush1.bf16.msra.mxu0 0
        %307 = vmatprep.subr.bf16.mxu0 0
        %308 = vmatpush1.bf16.msra.mxu0 0
        %309 = vmatprep.subr.bf16.mxu0 0
        %310 = vmatpush1.bf16.msra.mxu0 0
        %311 = vmatprep.subr.bf16.mxu0 0
        %312 = vmatpush1.bf16.msra.mxu0 0
        %313 = vmatprep.subr.bf16.mxu0 0
        %314 = vmatpush1.bf16.msra.mxu0 0
        %315 = vmatprep.subr.bf16.mxu0 0
        %316 = vmatpush1.bf16.msra.mxu0 0
        %317 = vmatprep.subr.bf16.mxu0 0
        %318 = vmatpush1.bf16.msra.mxu0 0
        %319 = vmatprep.subr.bf16.mxu0 0
        %320 = vmatpush1.bf16.msra.mxu0 0
        %321 = vmatprep.subr.bf16.mxu0 0
        %322 = vmatpush1.bf16.msra.mxu0 0
        %323 = vmatprep.subr.bf16.mxu0 0
        %324 = vmatpush1.bf16.msra.mxu0 0
        %325 = vmatprep.subr.bf16.mxu0 0
        %326 = vmatpush1.bf16.msra.mxu0 0
        %327 = vmatprep.mubr.bf16.mxu0 0
        %328 = vmatmul.mubr.bf16.gmra.mrb[0].mxu0 %v293
        %v329 = vpop.f32.mrb[0].mxu0
        %v330 = vadd.f32 0.0, %v329
        %v331 = vpop.f32.mrb[0].mxu0
        %v332 = vadd.f32 0.0, %v331
        %v333 = vpop.f32.mrb[0].mxu0
        %v334 = vpop.f32.mrb[0].mxu0
        %335 = vdwg.mxu0
        %336 = vmatprep.subr.bf16.mxu0 0
        %337 = vmatpush1.bf16.msra.mxu0 %v284
        %338 = vmatprep.subr.bf16.mxu0 0
        %339 = vmatpush1.bf16.msra.mxu0 0
        %340 = vmatprep.subr.bf16.mxu0 0
        %341 = vmatpush1.bf16.msra.mxu0 0
        %342 = vmatprep.subr.bf16.mxu0 0
        %343 = vmatpush1.bf16.msra.mxu0 0
        %344 = vmatprep.subr.bf16.mxu0 0
        %345 = vmatpush1.bf16.msra.mxu0 0
        %346 = vmatprep.subr.bf16.mxu0 0
        %347 = vmatpush1.bf16.msra.mxu0 0
        %348 = vmatprep.subr.bf16.mxu0 0
        %349 = vmatpush1.bf16.msra.mxu0 0
        %350 = vmatprep.subr.bf16.mxu0 0
        %351 = vmatpush1.bf16.msra.mxu0 0
        %352 = vmatprep.subr.bf16.mxu0 0
        %353 = vmatpush1.bf16.msra.mxu0 0
        %354 = vmatprep.subr.bf16.mxu0 0
        %355 = vmatpush1.bf16.msra.mxu0 0
        %356 = vmatprep.subr.bf16.mxu0 0
        %357 = vmatpush1.bf16.msra.mxu0 0
        %358 = vmatprep.subr.bf16.mxu0 0
        %359 = vmatpush1.bf16.msra.mxu0 0
        %360 = vmatprep.subr.bf16.mxu0 0
        %361 = vmatpush1.bf16.msra.mxu0 0
        %362 = vmatprep.subr.bf16.mxu0 0
        %363 = vmatpush1.bf16.msra.mxu0 0
        %364 = vmatprep.subr.bf16.mxu0 0
        %365 = vmatpush1.bf16.msra.mxu0 0
        %366 = vmatprep.subr.bf16.mxu0 0
        %367 = vmatpush1.bf16.msra.mxu0 0
        %368 = vmatprep.mubr.bf16.mxu0 0
        %369 = vmatmul.mubr.bf16.gmra.mrb[0].mxu0 %v293
        %v370 = vpop.f32.mrb[0].mxu0
        %v371 = vadd.f32 0.0, %v370
        %v372 = vpop.f32.mrb[0].mxu0
        %v373 = vpop.f32.mrb[0].mxu0
        %v374 = vpop.f32.mrb[0].mxu0
        %375 = vdwg.mxu0
        %v380 = vsel %vm291, %v263, 0
        %382 = vmatprep.subr.bf16.mxu0 %v277
        %383 = vmatpush1.bf16.msra.mxu0 %v276
        %384 = vmatprep.subr.bf16.mxu0 0
        %385 = vmatpush1.bf16.msra.mxu0 0
        %386 = vmatprep.subr.bf16.mxu0 0
        %387 = vmatpush1.bf16.msra.mxu0 0
        %388 = vmatprep.subr.bf16.mxu0 0
        %389 = vmatpush1.bf16.msra.mxu0 0
        %390 = vmatprep.subr.bf16.mxu0 0
        %391 = vmatpush1.bf16.msra.mxu0 0
        %392 = vmatprep.subr.bf16.mxu0 0
        %393 = vmatpush1.bf16.msra.mxu0 0
        %394 = vmatprep.subr.bf16.mxu0 0
        %395 = vmatpush1.bf16.msra.mxu0 0
        %396 = vmatprep.subr.bf16.mxu0 0
        %397 = vmatpush1.bf16.msra.mxu0 0
        %398 = vmatprep.subr.bf16.mxu0 0
        %399 = vmatpush1.bf16.msra.mxu0 0
        %400 = vmatprep.subr.bf16.mxu0 0
        %401 = vmatpush1.bf16.msra.mxu0 0
        %402 = vmatprep.subr.bf16.mxu0 0
        %403 = vmatpush1.bf16.msra.mxu0 0
        %404 = vmatprep.subr.bf16.mxu0 0
        %405 = vmatpush1.bf16.msra.mxu0 0
        %406 = vmatprep.subr.bf16.mxu0 0
        %407 = vmatpush1.bf16.msra.mxu0 0
        %408 = vmatprep.subr.bf16.mxu0 0
        %409 = vmatpush1.bf16.msra.mxu0 0
        %410 = vmatprep.subr.bf16.mxu0 0
        %411 = vmatpush1.bf16.msra.mxu0 0
        %412 = vmatprep.subr.bf16.mxu0 0
        %413 = vmatpush1.bf16.msra.mxu0 0
        %414 = vmatprep.mubr.bf16.mxu0 0
        %415 = vmatmul.mubr.bf16.gmra.mrb[0].mxu0 %v380
        %v416 = vpop.f32.mrb[0].mxu0
        %v417 = vadd.f32 %v330, %v416
        %v418 = vpop.f32.mrb[0].mxu0
        %v419 = vadd.f32 %v332, %v418
        %v420 = vpop.f32.mrb[0].mxu0
        %v421 = vpop.f32.mrb[0].mxu0
        %422 = vdwg.mxu0
        %423 = vmatprep.subr.bf16.mxu0 0
        %424 = vmatpush1.bf16.msra.mxu0 %v278
        %425 = vmatprep.subr.bf16.mxu0 0
        %426 = vmatpush1.bf16.msra.mxu0 0
        %427 = vmatprep.subr.bf16.mxu0 0
        %428 = vmatpush1.bf16.msra.mxu0 0
        %429 = vmatprep.subr.bf16.mxu0 0
        %430 = vmatpush1.bf16.msra.mxu0 0
        %431 = vmatprep.subr.bf16.mxu0 0
        %432 = vmatpush1.bf16.msra.mxu0 0
        %433 = vmatprep.subr.bf16.mxu0 0
        %434 = vmatpush1.bf16.msra.mxu0 0
        %435 = vmatprep.subr.bf16.mxu0 0
        %436 = vmatpush1.bf16.msra.mxu0 0
        %437 = vmatprep.subr.bf16.mxu0 0
        %438 = vmatpush1.bf16.msra.mxu0 0
        %439 = vmatprep.subr.bf16.mxu0 0
        %440 = vmatpush1.bf16.msra.mxu0 0
        %441 = vmatprep.subr.bf16.mxu0 0
        %442 = vmatpush1.bf16.msra.mxu0 0
        %443 = vmatprep.subr.bf16.mxu0 0
        %444 = vmatpush1.bf16.msra.mxu0 0
        %445 = vmatprep.subr.bf16.mxu0 0
        %446 = vmatpush1.bf16.msra.mxu0 0
        %447 = vmatprep.subr.bf16.mxu0 0
        %448 = vmatpush1.bf16.msra.mxu0 0
        %449 = vmatprep.subr.bf16.mxu0 0
        %450 = vmatpush1.bf16.msra.mxu0 0
        %451 = vmatprep.subr.bf16.mxu0 0
        %452 = vmatpush1.bf16.msra.mxu0 0
        %453 = vmatprep.subr.bf16.mxu0 0
        %454 = vmatpush1.bf16.msra.mxu0 0
        %455 = vmatprep.mubr.bf16.mxu0 0
        %456 = vmatmul.mubr.bf16.gmra.mrb[0].mxu0 %v380
        %v457 = vpop.f32.mrb[0].mxu0
        %v458 = vadd.f32 %v371, %v457
        %v459 = vpop.f32.mrb[0].mxu0
        %v460 = vpop.f32.mrb[0].mxu0
        %v461 = vpop.f32.mrb[0].mxu0
        %462 = vdwg.mxu0
        %s463 = scalar_lea.vmem [#allocation5], 8
        %v464 = vld [vmem:[%s463] sm:$0xf]
        %465 = vrot.lane.b32.xlu0 %v276, 126
        %v466 = vpop.permute.xlu0 %465
        %467 = vrot.lane.b32.xlu0 %v277, 126
        %v468 = vpop.permute.xlu0 %467
        %469 = vrot.lane.b32.xlu0 %v278, 126
        %v470 = vpop.permute.xlu0 %469
        %vm471 = vcmask 1031168
        %v472 = vsel %vm471, %v466, %v468
        %v473 = vsel %vm471, %v468, %v470
        %v478 = vsel %vm291, %v464, 0
        %480 = vmatprep.subr.bf16.mxu0 %v473
        %481 = vmatpush1.bf16.msra.mxu0 %v472
        %482 = vmatprep.subr.bf16.mxu0 0
        %483 = vmatpush1.bf16.msra.mxu0 0
        %484 = vmatprep.subr.bf16.mxu0 0
        %485 = vmatpush1.bf16.msra.mxu0 0
        %486 = vmatprep.subr.bf16.mxu0 0
        %487 = vmatpush1.bf16.msra.mxu0 0
        %488 = vmatprep.subr.bf16.mxu0 0
        %489 = vmatpush1.bf16.msra.mxu0 0
        %490 = vmatprep.subr.bf16.mxu0 0
        %491 = vmatpush1.bf16.msra.mxu0 0
        %492 = vmatprep.subr.bf16.mxu0 0
        %493 = vmatpush1.bf16.msra.mxu0 0
        %494 = vmatprep.subr.bf16.mxu0 0
        %495 = vmatpush1.bf16.msra.mxu0 0
        %496 = vmatprep.subr.bf16.mxu0 0
        %497 = vmatpush1.bf16.msra.mxu0 0
        %498 = vmatprep.subr.bf16.mxu0 0
        %499 = vmatpush1.bf16.msra.mxu0 0
        %500 = vmatprep.subr.bf16.mxu0 0
        %501 = vmatpush1.bf16.msra.mxu0 0
        %502 = vmatprep.subr.bf16.mxu0 0
        %503 = vmatpush1.bf16.msra.mxu0 0
        %504 = vmatprep.subr.bf16.mxu0 0
        %505 = vmatpush1.bf16.msra.mxu0 0
        %506 = vmatprep.subr.bf16.mxu0 0
        %507 = vmatpush1.bf16.msra.mxu0 0
        %508 = vmatprep.subr.bf16.mxu0 0
        %509 = vmatpush1.bf16.msra.mxu0 0
        %510 = vmatprep.subr.bf16.mxu0 0
        %511 = vmatpush1.bf16.msra.mxu0 0
        %512 = vmatprep.mubr.bf16.mxu0 0
        %513 = vmatmul.mubr.bf16.gmra.mrb[0].mxu0 %v478
        %v514 = vpop.f32.mrb[0].mxu0
        %v515 = vadd.f32 0.0, %v514
        %v516 = vpop.f32.mrb[0].mxu0
        %v517 = vadd.f32 0.0, %v516
        %v518 = vpop.f32.mrb[0].mxu0
        %v519 = vpop.f32.mrb[0].mxu0
        %520 = vdwg.mxu0
        %521 = vmatprep.subr.bf16.mxu0 0
        %522 = vmatpush1.bf16.msra.mxu0 %v470
        %523 = vmatprep.subr.bf16.mxu0 0
        %524 = vmatpush1.bf16.msra.mxu0 0
        %525 = vmatprep.subr.bf16.mxu0 0
        %526 = vmatpush1.bf16.msra.mxu0 0
        %527 = vmatprep.subr.bf16.mxu0 0
        %528 = vmatpush1.bf16.msra.mxu0 0
        %529 = vmatprep.subr.bf16.mxu0 0
        %530 = vmatpush1.bf16.msra.mxu0 0
        %531 = vmatprep.subr.bf16.mxu0 0
        %532 = vmatpush1.bf16.msra.mxu0 0
        %533 = vmatprep.subr.bf16.mxu0 0
        %534 = vmatpush1.bf16.msra.mxu0 0
        %535 = vmatprep.subr.bf16.mxu0 0
        %536 = vmatpush1.bf16.msra.mxu0 0
        %537 = vmatprep.subr.bf16.mxu0 0
        %538 = vmatpush1.bf16.msra.mxu0 0
        %539 = vmatprep.subr.bf16.mxu0 0
        %540 = vmatpush1.bf16.msra.mxu0 0
        %541 = vmatprep.subr.bf16.mxu0 0
        %542 = vmatpush1.bf16.msra.mxu0 0
        %543 = vmatprep.subr.bf16.mxu0 0
        %544 = vmatpush1.bf16.msra.mxu0 0
        %545 = vmatprep.subr.bf16.mxu0 0
        %546 = vmatpush1.bf16.msra.mxu0 0
        %547 = vmatprep.subr.bf16.mxu0 0
        %548 = vmatpush1.bf16.msra.mxu0 0
        %549 = vmatprep.subr.bf16.mxu0 0
        %550 = vmatpush1.bf16.msra.mxu0 0
        %551 = vmatprep.subr.bf16.mxu0 0
        %552 = vmatpush1.bf16.msra.mxu0 0
        %553 = vmatprep.mubr.bf16.mxu0 0
        %554 = vmatmul.mubr.bf16.gmra.mrb[0].mxu0 %v478
        %v555 = vpop.f32.mrb[0].mxu0
        %v556 = vadd.f32 0.0, %v555
        %v557 = vpop.f32.mrb[0].mxu0
        %v558 = vpop.f32.mrb[0].mxu0
        %v559 = vpop.f32.mrb[0].mxu0
        %560 = vdwg.mxu0
        %v561 = vadd.f32 %v417, %v515
        %v562 = vadd.f32 %v419, %v517
        %v563 = vadd.f32 %v458, %v556
        %s564 = scalar_lea.vmem [#allocation5], 12
        %v565 = vld [vmem:[%s564] sm:$0xf]
        %566 = vrot.lane.b32.xlu0 %v276, 110
        %v567 = vpop.permute.xlu0 %566
        %568 = vrot.lane.b32.xlu0 %v277, 110
        %v569 = vpop.permute.xlu0 %568
        %570 = vrot.lane.b32.xlu0 %v278, 110
        %v571 = vpop.permute.xlu0 %570
        %vm572 = vcmask 900096
        %v573 = vsel %vm572, %v567, %v569
        %v574 = vsel %vm572, %v569, %v571
        %v579 = vsel %vm291, %v565, 0
        %581 = vmatprep.subr.bf16.mxu0 %v574
        %582 = vmatpush1.bf16.msra.mxu0 %v573
        %583 = vmatprep.subr.bf16.mxu0 0
        %584 = vmatpush1.bf16.msra.mxu0 0
        %585 = vmatprep.subr.bf16.mxu0 0
        %586 = vmatpush1.bf16.msra.mxu0 0
        %587 = vmatprep.subr.bf16.mxu0 0
        %588 = vmatpush1.bf16.msra.mxu0 0
        %589 = vmatprep.subr.bf16.mxu0 0
        %590 = vmatpush1.bf16.msra.mxu0 0
        %591 = vmatprep.subr.bf16.mxu0 0
        %592 = vmatpush1.bf16.msra.mxu0 0
        %593 = vmatprep.subr.bf16.mxu0 0
        %594 = vmatpush1.bf16.msra.mxu0 0
        %595 = vmatprep.subr.bf16.mxu0 0
        %596 = vmatpush1.bf16.msra.mxu0 0
        %597 = vmatprep.subr.bf16.mxu0 0
        %598 = vmatpush1.bf16.msra.mxu0 0
        %599 = vmatprep.subr.bf16.mxu0 0
        %600 = vmatpush1.bf16.msra.mxu0 0
        %601 = vmatprep.subr.bf16.mxu0 0
        %602 = vmatpush1.bf16.msra.mxu0 0
        %603 = vmatprep.subr.bf16.mxu0 0
        %604 = vmatpush1.bf16.msra.mxu0 0
        %605 = vmatprep.subr.bf16.mxu0 0
        %606 = vmatpush1.bf16.msra.mxu0 0
        %607 = vmatprep.subr.bf16.mxu0 0
        %608 = vmatpush1.bf16.msra.mxu0 0
        %609 = vmatprep.subr.bf16.mxu0 0
        %610 = vmatpush1.bf16.msra.mxu0 0
        %611 = vmatprep.subr.bf16.mxu0 0
        %612 = vmatpush1.bf16.msra.mxu0 0
        %613 = vmatprep.mubr.bf16.mxu0 0
        %614 = vmatmul.mubr.bf16.gmra.mrb[0].mxu0 %v579
        %v615 = vpop.f32.mrb[0].mxu0
        %v616 = vadd.f32 0.0, %v615
        %v617 = vpop.f32.mrb[0].mxu0
        %v618 = vadd.f32 0.0, %v617
        %v619 = vpop.f32.mrb[0].mxu0
        %v620 = vpop.f32.mrb[0].mxu0
        %621 = vdwg.mxu0
        %622 = vmatprep.subr.bf16.mxu0 0
        %623 = vmatpush1.bf16.msra.mxu0 %v571
        %624 = vmatprep.subr.bf16.mxu0 0
        %625 = vmatpush1.bf16.msra.mxu0 0
        %626 = vmatprep.subr.bf16.mxu0 0
        %627 = vmatpush1.bf16.msra.mxu0 0
        %628 = vmatprep.subr.bf16.mxu0 0
        %629 = vmatpush1.bf16.msra.mxu0 0
        %630 = vmatprep.subr.bf16.mxu0 0
        %631 = vmatpush1.bf16.msra.mxu0 0
        %632 = vmatprep.subr.bf16.mxu0 0
        %633 = vmatpush1.bf16.msra.mxu0 0
        %634 = vmatprep.subr.bf16.mxu0 0
        %635 = vmatpush1.bf16.msra.mxu0 0
        %636 = vmatprep.subr.bf16.mxu0 0
        %637 = vmatpush1.bf16.msra.mxu0 0
        %638 = vmatprep.subr.bf16.mxu0 0
        %639 = vmatpush1.bf16.msra.mxu0 0
        %640 = vmatprep.subr.bf16.mxu0 0
        %641 = vmatpush1.bf16.msra.mxu0 0
        %642 = vmatprep.subr.bf16.mxu0 0
        %643 = vmatpush1.bf16.msra.mxu0 0
        %644 = vmatprep.subr.bf16.mxu0 0
        %645 = vmatpush1.bf16.msra.mxu0 0
        %646 = vmatprep.subr.bf16.mxu0 0
        %647 = vmatpush1.bf16.msra.mxu0 0
        %648 = vmatprep.subr.bf16.mxu0 0
        %649 = vmatpush1.bf16.msra.mxu0 0
        %650 = vmatprep.subr.bf16.mxu0 0
        %651 = vmatpush1.bf16.msra.mxu0 0
        %652 = vmatprep.subr.bf16.mxu0 0
        %653 = vmatpush1.bf16.msra.mxu0 0
        %654 = vmatprep.mubr.bf16.mxu0 0
        %655 = vmatmul.mubr.bf16.gmra.mrb[0].mxu0 %v579
        %v656 = vpop.f32.mrb[0].mxu0
        %v657 = vadd.f32 0.0, %v656
        %v658 = vpop.f32.mrb[0].mxu0
        %v659 = vpop.f32.mrb[0].mxu0
        %v660 = vpop.f32.mrb[0].mxu0
        %661 = vdwg.mxu0
        %v662 = vadd.f32 %v561, %v616
        %v663 = vadd.f32 %v562, %v618
        %v664 = vadd.f32 %v563, %v657
        %s665 = scalar_lea.vmem [#allocation5], 16
        %v666 = vld [vmem:[%s665] sm:$0xf]
        %667 = vrot.lane.b32.xlu0 %v276, 109
        %v668 = vpop.permute.xlu0 %667
        %669 = vrot.lane.b32.xlu0 %v277, 109
        %v670 = vpop.permute.xlu0 %669
        %671 = vrot.lane.b32.xlu0 %v278, 109
        %v672 = vpop.permute.xlu0 %671
        %vm673 = vcmask 891904
        %v674 = vsel %vm673, %v668, %v670
        %v675 = vsel %vm673, %v670, %v672
        %v680 = vsel %vm291, %v666, 0
        %682 = vmatprep.subr.bf16.mxu0 %v675
        %683 = vmatpush1.bf16.msra.mxu0 %v674
        %684 = vmatprep.subr.bf16.mxu0 0
        %685 = vmatpush1.bf16.msra.mxu0 0
        %686 = vmatprep.subr.bf16.mxu0 0
        %687 = vmatpush1.bf16.msra.mxu0 0
        %688 = vmatprep.subr.bf16.mxu0 0
        %689 = vmatpush1.bf16.msra.mxu0 0
        %690 = vmatprep.subr.bf16.mxu0 0
        %691 = vmatpush1.bf16.msra.mxu0 0
        %692 = vmatprep.subr.bf16.mxu0 0
        %693 = vmatpush1.bf16.msra.mxu0 0
        %694 = vmatprep.subr.bf16.mxu0 0
        %695 = vmatpush1.bf16.msra.mxu0 0
        %696 = vmatprep.subr.bf16.mxu0 0
        %697 = vmatpush1.bf16.msra.mxu0 0
        %698 = vmatprep.subr.bf16.mxu0 0
        %699 = vmatpush1.bf16.msra.mxu0 0
        %700 = vmatprep.subr.bf16.mxu0 0
        %701 = vmatpush1.bf16.msra.mxu0 0
        %702 = vmatprep.subr.bf16.mxu0 0
        %703 = vmatpush1.bf16.msra.mxu0 0
        %704 = vmatprep.subr.bf16.mxu0 0
        %705 = vmatpush1.bf16.msra.mxu0 0
        %706 = vmatprep.subr.bf16.mxu0 0
        %707 = vmatpush1.bf16.msra.mxu0 0
        %708 = vmatprep.subr.bf16.mxu0 0
        %709 = vmatpush1.bf16.msra.mxu0 0
        %710 = vmatprep.subr.bf16.mxu0 0
        %711 = vmatpush1.bf16.msra.mxu0 0
        %712 = vmatprep.subr.bf16.mxu0 0
        %713 = vmatpush1.bf16.msra.mxu0 0
        %714 = vmatprep.mubr.bf16.mxu0 0
        %715 = vmatmul.mubr.bf16.gmra.mrb[0].mxu0 %v680
        %v716 = vpop.f32.mrb[0].mxu0
        %v717 = vadd.f32 0.0, %v716
        %v718 = vpop.f32.mrb[0].mxu0
        %v719 = vadd.f32 0.0, %v718
        %v720 = vpop.f32.mrb[0].mxu0
        %v721 = vpop.f32.mrb[0].mxu0
        %722 = vdwg.mxu0
        %723 = vmatprep.subr.bf16.mxu0 0
        %724 = vmatpush1.bf16.msra.mxu0 %v672
        %725 = vmatprep.subr.bf16.mxu0 0
        %726 = vmatpush1.bf16.msra.mxu0 0
        %727 = vmatprep.subr.bf16.mxu0 0
        %728 = vmatpush1.bf16.msra.mxu0 0
        %729 = vmatprep.subr.bf16.mxu0 0
        %730 = vmatpush1.bf16.msra.mxu0 0
        %731 = vmatprep.subr.bf16.mxu0 0
        %732 = vmatpush1.bf16.msra.mxu0 0
        %733 = vmatprep.subr.bf16.mxu0 0
        %734 = vmatpush1.bf16.msra.mxu0 0
        %735 = vmatprep.subr.bf16.mxu0 0
        %736 = vmatpush1.bf16.msra.mxu0 0
        %737 = vmatprep.subr.bf16.mxu0 0
        %738 = vmatpush1.bf16.msra.mxu0 0
        %739 = vmatprep.subr.bf16.mxu0 0
        %740 = vmatpush1.bf16.msra.mxu0 0
        %741 = vmatprep.subr.bf16.mxu0 0
        %742 = vmatpush1.bf16.msra.mxu0 0
        %743 = vmatprep.subr.bf16.mxu0 0
        %744 = vmatpush1.bf16.msra.mxu0 0
        %745 = vmatprep.subr.bf16.mxu0 0
        %746 = vmatpush1.bf16.msra.mxu0 0
        %747 = vmatprep.subr.bf16.mxu0 0
        %748 = vmatpush1.bf16.msra.mxu0 0
        %749 = vmatprep.subr.bf16.mxu0 0
        %750 = vmatpush1.bf16.msra.mxu0 0
        %751 = vmatprep.subr.bf16.mxu0 0
        %752 = vmatpush1.bf16.msra.mxu0 0
        %753 = vmatprep.subr.bf16.mxu0 0
        %754 = vmatpush1.bf16.msra.mxu0 0
        %755 = vmatprep.mubr.bf16.mxu0 0
        %756 = vmatmul.mubr.bf16.gmra.mrb[0].mxu0 %v680
        %v757 = vpop.f32.mrb[0].mxu0
        %v758 = vadd.f32 0.0, %v757
        %v759 = vpop.f32.mrb[0].mxu0
        %v760 = vpop.f32.mrb[0].mxu0
        %v761 = vpop.f32.mrb[0].mxu0
        %762 = vdwg.mxu0
        %v763 = vadd.f32 %v662, %v717
        %v764 = vadd.f32 %v663, %v719
        %v765 = vadd.f32 %v664, %v758
        %s766 = scalar_lea.vmem [#allocation5], 20
        %v767 = vld [vmem:[%s766] sm:$0xf]
        %768 = vrot.lane.b32.xlu0 %v276, 108
        %v769 = vpop.permute.xlu0 %768
        %770 = vrot.lane.b32.xlu0 %v277, 108
        %v771 = vpop.permute.xlu0 %770
        %772 = vrot.lane.b32.xlu0 %v278, 108
        %v773 = vpop.permute.xlu0 %772
        %vm774 = vcmask 883712
        %v775 = vsel %vm774, %v769, %v771
        %v776 = vsel %vm774, %v771, %v773
        %v781 = vsel %vm291, %v767, 0
        %783 = vmatprep.subr.bf16.mxu0 %v776
        %784 = vmatpush1.bf16.msra.mxu0 %v775
        %785 = vmatprep.subr.bf16.mxu0 0
        %786 = vmatpush1.bf16.msra.mxu0 0
        %787 = vmatprep.subr.bf16.mxu0 0
        %788 = vmatpush1.bf16.msra.mxu0 0
        %789 = vmatprep.subr.bf16.mxu0 0
        %790 = vmatpush1.bf16.msra.mxu0 0
        %791 = vmatprep.subr.bf16.mxu0 0
        %792 = vmatpush1.bf16.msra.mxu0 0
        %793 = vmatprep.subr.bf16.mxu0 0
        %794 = vmatpush1.bf16.msra.mxu0 0
        %795 = vmatprep.subr.bf16.mxu0 0
        %796 = vmatpush1.bf16.msra.mxu0 0
        %797 = vmatprep.subr.bf16.mxu0 0
        %798 = vmatpush1.bf16.msra.mxu0 0
        %799 = vmatprep.subr.bf16.mxu0 0
        %800 = vmatpush1.bf16.msra.mxu0 0
        %801 = vmatprep.subr.bf16.mxu0 0
        %802 = vmatpush1.bf16.msra.mxu0 0
        %803 = vmatprep.subr.bf16.mxu0 0
        %804 = vmatpush1.bf16.msra.mxu0 0
        %805 = vmatprep.subr.bf16.mxu0 0
        %806 = vmatpush1.bf16.msra.mxu0 0
        %807 = vmatprep.subr.bf16.mxu0 0
        %808 = vmatpush1.bf16.msra.mxu0 0
        %809 = vmatprep.subr.bf16.mxu0 0
        %810 = vmatpush1.bf16.msra.mxu0 0
        %811 = vmatprep.subr.bf16.mxu0 0
        %812 = vmatpush1.bf16.msra.mxu0 0
        %813 = vmatprep.subr.bf16.mxu0 0
        %814 = vmatpush1.bf16.msra.mxu0 0
        %815 = vmatprep.mubr.bf16.mxu0 0
        %816 = vmatmul.mubr.bf16.gmra.mrb[0].mxu0 %v781
        %v817 = vpop.f32.mrb[0].mxu0
        %v818 = vadd.f32 0.0, %v817
        %v819 = vpop.f32.mrb[0].mxu0
        %v820 = vadd.f32 0.0, %v819
        %v821 = vpop.f32.mrb[0].mxu0
        %v822 = vpop.f32.mrb[0].mxu0
        %823 = vdwg.mxu0
        %824 = vmatprep.subr.bf16.mxu0 0
        %825 = vmatpush1.bf16.msra.mxu0 %v773
        %826 = vmatprep.subr.bf16.mxu0 0
        %827 = vmatpush1.bf16.msra.mxu0 0
        %828 = vmatprep.subr.bf16.mxu0 0
        %829 = vmatpush1.bf16.msra.mxu0 0
        %830 = vmatprep.subr.bf16.mxu0 0
        %831 = vmatpush1.bf16.msra.mxu0 0
        %832 = vmatprep.subr.bf16.mxu0 0
        %833 = vmatpush1.bf16.msra.mxu0 0
        %834 = vmatprep.subr.bf16.mxu0 0
        %835 = vmatpush1.bf16.msra.mxu0 0
        %836 = vmatprep.subr.bf16.mxu0 0
        %837 = vmatpush1.bf16.msra.mxu0 0
        %838 = vmatprep.subr.bf16.mxu0 0
        %839 = vmatpush1.bf16.msra.mxu0 0
        %840 = vmatprep.subr.bf16.mxu0 0
        %841 = vmatpush1.bf16.msra.mxu0 0
        %842 = vmatprep.subr.bf16.mxu0 0
        %843 = vmatpush1.bf16.msra.mxu0 0
        %844 = vmatprep.subr.bf16.mxu0 0
        %845 = vmatpush1.bf16.msra.mxu0 0
        %846 = vmatprep.subr.bf16.mxu0 0
        %847 = vmatpush1.bf16.msra.mxu0 0
        %848 = vmatprep.subr.bf16.mxu0 0
        %849 = vmatpush1.bf16.msra.mxu0 0
        %850 = vmatprep.subr.bf16.mxu0 0
        %851 = vmatpush1.bf16.msra.mxu0 0
        %852 = vmatprep.subr.bf16.mxu0 0
        %853 = vmatpush1.bf16.msra.mxu0 0
        %854 = vmatprep.subr.bf16.mxu0 0
        %855 = vmatpush1.bf16.msra.mxu0 0
        %856 = vmatprep.mubr.bf16.mxu0 0
        %857 = vmatmul.mubr.bf16.gmra.mrb[0].mxu0 %v781
        %v858 = vpop.f32.mrb[0].mxu0
        %v859 = vadd.f32 0.0, %v858
        %v860 = vpop.f32.mrb[0].mxu0
        %v861 = vpop.f32.mrb[0].mxu0
        %v862 = vpop.f32.mrb[0].mxu0
        %863 = vdwg.mxu0
        %v864 = vadd.f32 %v763, %v818
        %v865 = vadd.f32 %v764, %v820
        %v866 = vadd.f32 %v765, %v859
        %s867 = scalar_lea.vmem [#allocation5], 24
        %v868 = vld [vmem:[%s867] sm:$0xf]
        %869 = vrot.lane.b32.xlu0 %v276, 92
        %v870 = vpop.permute.xlu0 %869
        %871 = vrot.lane.b32.xlu0 %v277, 92
        %v872 = vpop.permute.xlu0 %871
        %873 = vrot.lane.b32.xlu0 %v278, 92
        %v874 = vpop.permute.xlu0 %873
        %vm875 = vcmask 752640
        %v876 = vsel %vm875, %v870, %v872
        %v877 = vsel %vm875, %v872, %v874
        %v882 = vsel %vm291, %v868, 0
        %884 = vmatprep.subr.bf16.mxu0 %v877
        %885 = vmatpush1.bf16.msra.mxu0 %v876
        %886 = vmatprep.subr.bf16.mxu0 0
        %887 = vmatpush1.bf16.msra.mxu0 0
        %888 = vmatprep.subr.bf16.mxu0 0
        %889 = vmatpush1.bf16.msra.mxu0 0
        %890 = vmatprep.subr.bf16.mxu0 0
        %891 = vmatpush1.bf16.msra.mxu0 0
        %892 = vmatprep.subr.bf16.mxu0 0
        %893 = vmatpush1.bf16.msra.mxu0 0
        %894 = vmatprep.subr.bf16.mxu0 0
        %895 = vmatpush1.bf16.msra.mxu0 0
        %896 = vmatprep.subr.bf16.mxu0 0
        %897 = vmatpush1.bf16.msra.mxu0 0
        %898 = vmatprep.subr.bf16.mxu0 0
        %899 = vmatpush1.bf16.msra.mxu0 0
        %900 = vmatprep.subr.bf16.mxu0 0
        %901 = vmatpush1.bf16.msra.mxu0 0
        %902 = vmatprep.subr.bf16.mxu0 0
        %903 = vmatpush1.bf16.msra.mxu0 0
        %904 = vmatprep.subr.bf16.mxu0 0
        %905 = vmatpush1.bf16.msra.mxu0 0
        %906 = vmatprep.subr.bf16.mxu0 0
        %907 = vmatpush1.bf16.msra.mxu0 0
        %908 = vmatprep.subr.bf16.mxu0 0
        %909 = vmatpush1.bf16.msra.mxu0 0
        %910 = vmatprep.subr.bf16.mxu0 0
        %911 = vmatpush1.bf16.msra.mxu0 0
        %912 = vmatprep.subr.bf16.mxu0 0
        %913 = vmatpush1.bf16.msra.mxu0 0
        %914 = vmatprep.subr.bf16.mxu0 0
        %915 = vmatpush1.bf16.msra.mxu0 0
        %916 = vmatprep.mubr.bf16.mxu0 0
        %917 = vmatmul.mubr.bf16.gmra.mrb[0].mxu0 %v882
        %v918 = vpop.f32.mrb[0].mxu0
        %v919 = vadd.f32 0.0, %v918
        %v920 = vpop.f32.mrb[0].mxu0
        %v921 = vadd.f32 0.0, %v920
        %v922 = vpop.f32.mrb[0].mxu0
        %v923 = vpop.f32.mrb[0].mxu0
        %924 = vdwg.mxu0
        %925 = vmatprep.subr.bf16.mxu0 0
        %926 = vmatpush1.bf16.msra.mxu0 %v874
        %927 = vmatprep.subr.bf16.mxu0 0
        %928 = vmatpush1.bf16.msra.mxu0 0
        %929 = vmatprep.subr.bf16.mxu0 0
        %930 = vmatpush1.bf16.msra.mxu0 0
        %931 = vmatprep.subr.bf16.mxu0 0
        %932 = vmatpush1.bf16.msra.mxu0 0
        %933 = vmatprep.subr.bf16.mxu0 0
        %934 = vmatpush1.bf16.msra.mxu0 0
        %935 = vmatprep.subr.bf16.mxu0 0
        %936 = vmatpush1.bf16.msra.mxu0 0
        %937 = vmatprep.subr.bf16.mxu0 0
        %938 = vmatpush1.bf16.msra.mxu0 0
        %939 = vmatprep.subr.bf16.mxu0 0
        %940 = vmatpush1.bf16.msra.mxu0 0
        %941 = vmatprep.subr.bf16.mxu0 0
        %942 = vmatpush1.bf16.msra.mxu0 0
        %943 = vmatprep.subr.bf16.mxu0 0
        %944 = vmatpush1.bf16.msra.mxu0 0
        %945 = vmatprep.subr.bf16.mxu0 0
        %946 = vmatpush1.bf16.msra.mxu0 0
        %947 = vmatprep.subr.bf16.mxu0 0
        %948 = vmatpush1.bf16.msra.mxu0 0
        %949 = vmatprep.subr.bf16.mxu0 0
        %950 = vmatpush1.bf16.msra.mxu0 0
        %951 = vmatprep.subr.bf16.mxu0 0
        %952 = vmatpush1.bf16.msra.mxu0 0
        %953 = vmatprep.subr.bf16.mxu0 0
        %954 = vmatpush1.bf16.msra.mxu0 0
        %955 = vmatprep.subr.bf16.mxu0 0
        %956 = vmatpush1.bf16.msra.mxu0 0
        %957 = vmatprep.mubr.bf16.mxu0 0
        %958 = vmatmul.mubr.bf16.gmra.mrb[0].mxu0 %v882
        %v959 = vpop.f32.mrb[0].mxu0
        %v960 = vadd.f32 0.0, %v959
        %v961 = vpop.f32.mrb[0].mxu0
        %v962 = vpop.f32.mrb[0].mxu0
        %v963 = vpop.f32.mrb[0].mxu0
        %964 = vdwg.mxu0
        %v965 = vadd.f32 %v864, %v919
        %v966 = vadd.f32 %v865, %v921
        %v967 = vadd.f32 %v866, %v960
        %s968 = scalar_lea.vmem [#allocation5], 28
        %v969 = vld [vmem:[%s968] sm:$0xf]
        %970 = vrot.lane.b32.xlu0 %v276, 91
        %v971 = vpop.permute.xlu0 %970
        %972 = vrot.lane.b32.xlu0 %v277, 91
        %v973 = vpop.permute.xlu0 %972
        %974 = vrot.lane.b32.xlu0 %v278, 91
        %v975 = vpop.permute.xlu0 %974
        %vm976 = vcmask 744448
        %v977 = vsel %vm976, %v971, %v973
        %v978 = vsel %vm976, %v973, %v975
        %v983 = vsel %vm291, %v969, 0
        %985 = vmatprep.subr.bf16.mxu0 %v978
        %986 = vmatpush1.bf16.msra.mxu0 %v977
        %987 = vmatprep.subr.bf16.mxu0 0
        %988 = vmatpush1.bf16.msra.mxu0 0
        %989 = vmatprep.subr.bf16.mxu0 0
        %990 = vmatpush1.bf16.msra.mxu0 0
        %991 = vmatprep.subr.bf16.mxu0 0
        %992 = vmatpush1.bf16.msra.mxu0 0
        %993 = vmatprep.subr.bf16.mxu0 0
        %994 = vmatpush1.bf16.msra.mxu0 0
        %995 = vmatprep.subr.bf16.mxu0 0
        %996 = vmatpush1.bf16.msra.mxu0 0
        %997 = vmatprep.subr.bf16.mxu0 0
        %998 = vmatpush1.bf16.msra.mxu0 0
        %999 = vmatprep.subr.bf16.mxu0 0
        %1000 = vmatpush1.bf16.msra.mxu0 0
        %1001 = vmatprep.subr.bf16.mxu0 0
        %1002 = vmatpush1.bf16.msra.mxu0 0
        %1003 = vmatprep.subr.bf16.mxu0 0
        %1004 = vmatpush1.bf16.msra.mxu0 0
        %1005 = vmatprep.subr.bf16.mxu0 0
        %1006 = vmatpush1.bf16.msra.mxu0 0
        %1007 = vmatprep.subr.bf16.mxu0 0
        %1008 = vmatpush1.bf16.msra.mxu0 0
        %1009 = vmatprep.subr.bf16.mxu0 0
        %1010 = vmatpush1.bf16.msra.mxu0 0
        %1011 = vmatprep.subr.bf16.mxu0 0
        %1012 = vmatpush1.bf16.msra.mxu0 0
        %1013 = vmatprep.subr.bf16.mxu0 0
        %1014 = vmatpush1.bf16.msra.mxu0 0
        %1015 = vmatprep.subr.bf16.mxu0 0
        %1016 = vmatpush1.bf16.msra.mxu0 0
        %1017 = vmatprep.mubr.bf16.mxu0 0
        %1018 = vmatmul.mubr.bf16.gmra.mrb[0].mxu0 %v983
        %v1019 = vpop.f32.mrb[0].mxu0
        %v1020 = vadd.f32 0.0, %v1019
        %v1021 = vpop.f32.mrb[0].mxu0
        %v1022 = vadd.f32 0.0, %v1021
        %v1023 = vpop.f32.mrb[0].mxu0
        %v1024 = vpop.f32.mrb[0].mxu0
        %1025 = vdwg.mxu0
        %1026 = vmatprep.subr.bf16.mxu0 0
        %1027 = vmatpush1.bf16.msra.mxu0 %v975
        %1028 = vmatprep.subr.bf16.mxu0 0
        %1029 = vmatpush1.bf16.msra.mxu0 0
        %1030 = vmatprep.subr.bf16.mxu0 0
        %1031 = vmatpush1.bf16.msra.mxu0 0
        %1032 = vmatprep.subr.bf16.mxu0 0
        %1033 = vmatpush1.bf16.msra.mxu0 0
        %1034 = vmatprep.subr.bf16.mxu0 0
        %1035 = vmatpush1.bf16.msra.mxu0 0
        %1036 = vmatprep.subr.bf16.mxu0 0
        %1037 = vmatpush1.bf16.msra.mxu0 0
        %1038 = vmatprep.subr.bf16.mxu0 0
        %1039 = vmatpush1.bf16.msra.mxu0 0
        %1040 = vmatprep.subr.bf16.mxu0 0
        %1041 = vmatpush1.bf16.msra.mxu0 0
        %1042 = vmatprep.subr.bf16.mxu0 0
        %1043 = vmatpush1.bf16.msra.mxu0 0
        %1044 = vmatprep.subr.bf16.mxu0 0
        %1045 = vmatpush1.bf16.msra.mxu0 0
        %1046 = vmatprep.subr.bf16.mxu0 0
        %1047 = vmatpush1.bf16.msra.mxu0 0
        %1048 = vmatprep.subr.bf16.mxu0 0
        %1049 = vmatpush1.bf16.msra.mxu0 0
        %1050 = vmatprep.subr.bf16.mxu0 0
        %1051 = vmatpush1.bf16.msra.mxu0 0
        %1052 = vmatprep.subr.bf16.mxu0 0
        %1053 = vmatpush1.bf16.msra.mxu0 0
        %1054 = vmatprep.subr.bf16.mxu0 0
        %1055 = vmatpush1.bf16.msra.mxu0 0
        %1056 = vmatprep.subr.bf16.mxu0 0
        %1057 = vmatpush1.bf16.msra.mxu0 0
        %1058 = vmatprep.mubr.bf16.mxu0 0
        %1059 = vmatmul.mubr.bf16.gmra.mrb[0].mxu0 %v983
        %v1060 = vpop.f32.mrb[0].mxu0
        %v1061 = vadd.f32 0.0, %v1060
        %v1062 = vpop.f32.mrb[0].mxu0
        %v1063 = vpop.f32.mrb[0].mxu0
        %v1064 = vpop.f32.mrb[0].mxu0
        %1065 = vdwg.mxu0
        %v1066 = vadd.f32 %v965, %v1020
        %v1067 = vadd.f32 %v966, %v1022
        %v1068 = vadd.f32 %v967, %v1061
        %s1069 = scalar_lea.vmem [#allocation5], 32
        %v1070 = vld [vmem:[%s1069] sm:$0xf]
        %1071 = vrot.lane.b32.xlu0 %v276, 90
        %v1072 = vpop.permute.xlu0 %1071
        %1073 = vrot.lane.b32.xlu0 %v277, 90
        %v1074 = vpop.permute.xlu0 %1073
        %1075 = vrot.lane.b32.xlu0 %v278, 90
        %v1076 = vpop.permute.xlu0 %1075
        %vm1077 = vcmask 736256
        %v1078 = vsel %vm1077, %v1072, %v1074
        %v1079 = vsel %vm1077, %v1074, %v1076
        %v1084 = vsel %vm291, %v1070, 0
        %1086 = vmatprep.subr.bf16.mxu0 %v1079
        %1087 = vmatpush1.bf16.msra.mxu0 %v1078
        %1088 = vmatprep.subr.bf16.mxu0 0
        %1089 = vmatpush1.bf16.msra.mxu0 0
        %1090 = vmatprep.subr.bf16.mxu0 0
        %1091 = vmatpush1.bf16.msra.mxu0 0
        %1092 = vmatprep.subr.bf16.mxu0 0
        %1093 = vmatpush1.bf16.msra.mxu0 0
        %1094 = vmatprep.subr.bf16.mxu0 0
        %1095 = vmatpush1.bf16.msra.mxu0 0
        %1096 = vmatprep.subr.bf16.mxu0 0
        %1097 = vmatpush1.bf16.msra.mxu0 0
        %1098 = vmatprep.subr.bf16.mxu0 0
        %1099 = vmatpush1.bf16.msra.mxu0 0
        %1100 = vmatprep.subr.bf16.mxu0 0
        %1101 = vmatpush1.bf16.msra.mxu0 0
        %1102 = vmatprep.subr.bf16.mxu0 0
        %1103 = vmatpush1.bf16.msra.mxu0 0
        %1104 = vmatprep.subr.bf16.mxu0 0
        %1105 = vmatpush1.bf16.msra.mxu0 0
        %1106 = vmatprep.subr.bf16.mxu0 0
        %1107 = vmatpush1.bf16.msra.mxu0 0
        %1108 = vmatprep.subr.bf16.mxu0 0
        %1109 = vmatpush1.bf16.msra.mxu0 0
        %1110 = vmatprep.subr.bf16.mxu0 0
        %1111 = vmatpush1.bf16.msra.mxu0 0
        %1112 = vmatprep.subr.bf16.mxu0 0
        %1113 = vmatpush1.bf16.msra.mxu0 0
        %1114 = vmatprep.subr.bf16.mxu0 0
        %1115 = vmatpush1.bf16.msra.mxu0 0
        %1116 = vmatprep.subr.bf16.mxu0 0
        %1117 = vmatpush1.bf16.msra.mxu0 0
        %1118 = vmatprep.mubr.bf16.mxu0 0
        %1119 = vmatmul.mubr.bf16.gmra.mrb[0].mxu0 %v1084
        %v1120 = vpop.f32.mrb[0].mxu0
        %v1121 = vadd.f32 0.0, %v1120
        %v1122 = vpop.f32.mrb[0].mxu0
        %v1123 = vadd.f32 0.0, %v1122
        %v1124 = vpop.f32.mrb[0].mxu0
        %v1125 = vpop.f32.mrb[0].mxu0
        %1126 = vdwg.mxu0
        %1127 = vmatprep.subr.bf16.mxu0 0
        %1128 = vmatpush1.bf16.msra.mxu0 %v1076
        %1129 = vmatprep.subr.bf16.mxu0 0
        %1130 = vmatpush1.bf16.msra.mxu0 0
        %1131 = vmatprep.subr.bf16.mxu0 0
        %1132 = vmatpush1.bf16.msra.mxu0 0
        %1133 = vmatprep.subr.bf16.mxu0 0
        %1134 = vmatpush1.bf16.msra.mxu0 0
        %1135 = vmatprep.subr.bf16.mxu0 0
        %1136 = vmatpush1.bf16.msra.mxu0 0
        %1137 = vmatprep.subr.bf16.mxu0 0
        %1138 = vmatpush1.bf16.msra.mxu0 0
        %1139 = vmatprep.subr.bf16.mxu0 0
        %1140 = vmatpush1.bf16.msra.mxu0 0
        %1141 = vmatprep.subr.bf16.mxu0 0
        %1142 = vmatpush1.bf16.msra.mxu0 0
        %1143 = vmatprep.subr.bf16.mxu0 0
        %1144 = vmatpush1.bf16.msra.mxu0 0
        %1145 = vmatprep.subr.bf16.mxu0 0
        %1146 = vmatpush1.bf16.msra.mxu0 0
        %1147 = vmatprep.subr.bf16.mxu0 0
        %1148 = vmatpush1.bf16.msra.mxu0 0
        %1149 = vmatprep.subr.bf16.mxu0 0
        %1150 = vmatpush1.bf16.msra.mxu0 0
        %1151 = vmatprep.subr.bf16.mxu0 0
        %1152 = vmatpush1.bf16.msra.mxu0 0
        %1153 = vmatprep.subr.bf16.mxu0 0
        %1154 = vmatpush1.bf16.msra.mxu0 0
        %1155 = vmatprep.subr.bf16.mxu0 0
        %1156 = vmatpush1.bf16.msra.mxu0 0
        %1157 = vmatprep.subr.bf16.mxu0 0
        %1158 = vmatpush1.bf16.msra.mxu0 0
        %1159 = vmatprep.mubr.bf16.mxu0 0
        %1160 = vmatmul.mubr.bf16.gmra.mrb[0].mxu0 %v1084
        %v1161 = vpop.f32.mrb[0].mxu0
        %v1162 = vadd.f32 0.0, %v1161
        %v1163 = vpop.f32.mrb[0].mxu0
        %v1164 = vpop.f32.mrb[0].mxu0
        %v1165 = vpop.f32.mrb[0].mxu0
        %1166 = vdwg.mxu0
        %v1167 = vadd.f32 %v1066, %v1121
        %v1168 = vadd.f32 %v1067, %v1123
        %v1169 = vadd.f32 %v1068, %v1162
        %v1170 = vld [vmem:[%s2] sm:$0xff]
        %1172 = vset.pattern.permute.xlu0 0
        %1173 = vperm.xlu0 %1172, %v1170
        %v1174 = vpop.permute.xlu0 %1173
        %v1176 = vadd.f32 %v1167, %v1174
        %v1177 = vadd.f32 %v1168, %v1174
        %v1178 = vadd.f32 %v1169, %v1174
        %v1179 = vmax.f32 %v1176, 0.0
        %v1180 = vmax.f32 %v1177, 0.0
        %v1181 = vmax.f32 %v1178, 0.0
        %v1182 = vld [vmem:[%s3] sm:$0xf]
        %v1183 = vpack.c.bf16 %v1179, %v1179
        %v1184 = vpack.c.bf16 %v1180, %v1180
        %v1185 = vpack.c.bf16 %v1181, %v1181
        %v1186 = vld [vmem:[%s4] sm:$0xff]
        %1188 = vset.pattern.permute.xlu0 0
        %1189 = vperm.xlu0 %1188, %v1186
        %v1190 = vpop.permute.xlu0 %1189
        %vm1192 = vcmask 64512
        %v1194 = vsel %vm1192, %v1182, 0
        %vm1196 = vcmask 1043456
        %v1198 = vsel %vm1196, %v1183, 0
        %v1201 = vsel %vm1196, %v1184, 0
        %v1204 = vsel %vm1196, %v1185, 0
        %1206 = vmatprep.subr.bf16.mxu0 %v1201
        %1207 = vmatpush1.bf16.msra.mxu0 %v1198
        %1208 = vmatprep.subr.bf16.mxu0 0
        %1209 = vmatpush1.bf16.msra.mxu0 0
        %1210 = vmatprep.subr.bf16.mxu0 0
        %1211 = vmatpush1.bf16.msra.mxu0 0
        %1212 = vmatprep.subr.bf16.mxu0 0
        %1213 = vmatpush1.bf16.msra.mxu0 0
        %1214 = vmatprep.subr.bf16.mxu0 0
        %1215 = vmatpush1.bf16.msra.mxu0 0
        %1216 = vmatprep.subr.bf16.mxu0 0
        %1217 = vmatpush1.bf16.msra.mxu0 0
        %1218 = vmatprep.subr.bf16.mxu0 0
        %1219 = vmatpush1.bf16.msra.mxu0 0
        %1220 = vmatprep.subr.bf16.mxu0 0
        %1221 = vmatpush1.bf16.msra.mxu0 0
        %1222 = vmatprep.subr.bf16.mxu0 0
        %1223 = vmatpush1.bf16.msra.mxu0 0
        %1224 = vmatprep.subr.bf16.mxu0 0
        %1225 = vmatpush1.bf16.msra.mxu0 0
        %1226 = vmatprep.subr.bf16.mxu0 0
        %1227 = vmatpush1.bf16.msra.mxu0 0
        %1228 = vmatprep.subr.bf16.mxu0 0
        %1229 = vmatpush1.bf16.msra.mxu0 0
        %1230 = vmatprep.subr.bf16.mxu0 0
        %1231 = vmatpush1.bf16.msra.mxu0 0
        %1232 = vmatprep.subr.bf16.mxu0 0
        %1233 = vmatpush1.bf16.msra.mxu0 0
        %1234 = vmatprep.subr.bf16.mxu0 0
        %1235 = vmatpush1.bf16.msra.mxu0 0
        %1236 = vmatprep.subr.bf16.mxu0 0
        %1237 = vmatpush1.bf16.msra.mxu0 0
        %1238 = vmatprep.mubr.bf16.mxu0 0
        %1239 = vmatmul.mubr.bf16.gmra.mrb[0].mxu0 %v1194
        %v1240 = vpop.f32.mrb[0].mxu0
        %v1241 = vadd.f32 %v1190, %v1240
        %v1242 = vpop.f32.mrb[0].mxu0
        %v1243 = vadd.f32 %v1190, %v1242
        %v1244 = vpop.f32.mrb[0].mxu0
        %v1245 = vpop.f32.mrb[0].mxu0
        %1246 = vdwg.mxu0
        %1247 = vmatprep.subr.bf16.mxu0 0
        %1248 = vmatpush1.bf16.msra.mxu0 %v1204
        %1249 = vmatprep.subr.bf16.mxu0 0
        %1250 = vmatpush1.bf16.msra.mxu0 0
        %1251 = vmatprep.subr.bf16.mxu0 0
        %1252 = vmatpush1.bf16.msra.mxu0 0
        %1253 = vmatprep.subr.bf16.mxu0 0
        %1254 = vmatpush1.bf16.msra.mxu0 0
        %1255 = vmatprep.subr.bf16.mxu0 0
        %1256 = vmatpush1.bf16.msra.mxu0 0
        %1257 = vmatprep.subr.bf16.mxu0 0
        %1258 = vmatpush1.bf16.msra.mxu0 0
        %1259 = vmatprep.subr.bf16.mxu0 0
        %1260 = vmatpush1.bf16.msra.mxu0 0
        %1261 = vmatprep.subr.bf16.mxu0 0
        %1262 = vmatpush1.bf16.msra.mxu0 0
        %1263 = vmatprep.subr.bf16.mxu0 0
        %1264 = vmatpush1.bf16.msra.mxu0 0
        %1265 = vmatprep.subr.bf16.mxu0 0
        %1266 = vmatpush1.bf16.msra.mxu0 0
        %1267 = vmatprep.subr.bf16.mxu0 0
        %1268 = vmatpush1.bf16.msra.mxu0 0
        %1269 = vmatprep.subr.bf16.mxu0 0
        %1270 = vmatpush1.bf16.msra.mxu0 0
        %1271 = vmatprep.subr.bf16.mxu0 0
        %1272 = vmatpush1.bf16.msra.mxu0 0
        %1273 = vmatprep.subr.bf16.mxu0 0
        %1274 = vmatpush1.bf16.msra.mxu0 0
        %1275 = vmatprep.subr.bf16.mxu0 0
        %1276 = vmatpush1.bf16.msra.mxu0 0
        %1277 = vmatprep.subr.bf16.mxu0 0
        %1278 = vmatpush1.bf16.msra.mxu0 0
        %1279 = vmatprep.mubr.bf16.mxu0 0
        %1280 = vmatmul.mubr.bf16.gmra.mrb[0].mxu0 %v1194
        %v1281 = vpop.f32.mrb[0].mxu0
        %v1282 = vadd.f32 %v1190, %v1281
        %v1283 = vpop.f32.mrb[0].mxu0
        %v1284 = vpop.f32.mrb[0].mxu0
        %v1285 = vpop.f32.mrb[0].mxu0
        %1286 = vdwg.mxu0
        %1287 = vst [vmem:[%s257] sm:$0xff] %v1241
        %1288 = vst [vmem:[%s257 + $0x8] sm:$0xff] %v1243
        %vm1289 = vcmask 261120
        %1290 = vst.msk [vmem:[%s257 + $0x10] sm:$0xff] %vm1289, %v1282
        %s1291 = sand.u32 %s141, 1
        %s1292 = scalar_lea.sflag [#allocation4], %s1291
        %s1293 = sand.u32 %s141, 1
        %s1294 = smul.addr %s1293, 24
        %s1295 = scalar_lea.vmem [#allocation7], %s1294
        // Predicated region
        $region49: #{tpu_custom_call.1} parent=39 // pred_check
          %p1296 = pneg %p151
        $region50: #{tpu_custom_call.1} parent=39 // pred_check_branch
          %1298 = sbr.rel (%p1296) target = $region52
        $region51: #{tpu_custom_call.1} parent=39 // pred_region
          %s1300 = ssub.s32 384, 384
          %1301 = vsyncadd %s1292, %s1300
          %s1302 = smul.addr %s23, 3
          %s1303 = smul.addr %s1302, 128
          %s1304 = scalar_lea.hbm %s5, %s1303
          %s1306 = sshll.u32 %s1295, 4
          %s1307 = int_to_ptr.vmem [resolvable:$true] %s1306
          %1309 = dma.vmem_to_hbm [thread:$0]  %s1307, 384, %s1304, %s1292
        $region52: #{tpu_custom_call.1} parent=39 // pred_fallthru
          _
      $region40: #{tpu_custom_call.1} parent=5 // pred_fallthru
        _
      %p1310 = scmp.le.s32.totalorder 2, %s18
      // Predicated region
      $region53: #{tpu_custom_call.1} parent=5 // pred_check
        %p1311 = pneg %p1310
      $region54: #{tpu_custom_call.1} parent=5 // pred_check_branch
        %1313 = sbr.rel (%p1311) target = $region56
      $region55: #{tpu_custom_call.1} parent=5 // pred_region
        %s1314 = ssub.s32 %s18, 2
        // Predicated region
        $region57: #{tpu_custom_call.1} parent=55 // pred_check
          %p1315 = pneg %p157
        $region58: #{tpu_custom_call.1} parent=55 // pred_check_branch
          %1317 = sbr.rel (%p1315) target = $region60
        $region59: #{tpu_custom_call.1} parent=55 // pred_region
          %s1318 = sand.u32 %s142, 1
          %s1319 = scalar_lea.sflag [#allocation4], %s1318
          %s1320 = sand.u32 %s142, 1
          %s1321 = smul.addr %s1320, 24
          %s1322 = scalar_lea.vmem [#allocation7], %s1321
          %1323 = dma.done %s1319, 384
        $region60: #{tpu_custom_call.1} parent=55 // pred_fallthru
          _
      $region56: #{tpu_custom_call.1} parent=5 // pred_fallthru
        _
    $region6: #{tpu_custom_call.1} parent=1 // loop_footer
      %s22 = sadd.s32 1, %s18
    $region7: #{tpu_custom_call.1} parent=1 // loop_footer_branch
      %17 = sbr.rel target = $region3
    $region8: #{tpu_custom_call.1} parent=1 // loop_exit
      _
    %1324 = vsyncpa [#allocation3], 1
    %s1325 = scalar_lea.sflag [#allocation3], 1
    %1326 = vsyncpa %s1325, 1
    %1327 = vsyncpa [#allocation6], 1
    %1328 = vsyncpa [#allocation4], 1
    %s1329 = scalar_lea.sflag [#allocation4], 1
    %1330 = vsyncpa %s1329, 1

</llo_original>
